<compile_context>
chip_gen: v5e
topology: v5e:2x2
jax: 0.10.0
libtpu: 0.0.40
codegen_flags: <defaults>
</compile_context>

<pallas_src>
import functools
import math

import jax
import jax.numpy as jnp
from jax.experimental import pallas as pl
from jax.experimental.pallas import tpu as pltpu


# ------------------------------- helpers ------------------------------------ #

def _pick_tile(dim, target, align):
    """Largest multiple of `align` dividing `dim` that is <= target; falls back
    to the full dimension (a block equal to the array dim is always legal)."""
    if dim <= target:
        return dim
    t = min(target, dim) - (min(target, dim) % align)
    while t >= align:
        if dim % t == 0:
            return t
        t -= align
    return dim


@functools.lru_cache(maxsize=None)
def _vmem_limit_bytes():
    """Generation-aware scoped-VMEM limit (v7x has only 64 MiB per TC)."""
    cap = 128 * 1024 * 1024
    try:
        cap = int(pltpu.get_tpu_info().vmem_capacity_bytes)
    except Exception:
        pass
    if cap <= 64 * 1024 * 1024:
        return 48 * 1024 * 1024          # v7x: leave headroom out of 64 MiB/TC
    return 96 * 1024 * 1024              # v5e / v6e: 128 MiB physical


def _cparams(semantics):
    return pltpu.CompilerParams(
        dimension_semantics=semantics,
        vmem_limit_bytes=_vmem_limit_bytes(),
    )


def _apply_act(y, act):
    if act == "tanh":
        return jnp.tanh(y)
    if act == "gelu":
        # TODO(synk): HF BERT uses exact erf-GELU; tanh approximation used here.
        c = math.sqrt(2.0 / math.pi)
        return 0.5 * y * (1.0 + jnp.tanh(c * (y + 0.044715 * y * y * y)))
    return y


# ---------------------------- Pallas kernels -------------------------------- #

def _dense_kernel(x_ref, w_ref, b_ref, o_ref, *, act):
    """y = act(x @ w + b); bf16 MXU inputs, f32 accumulate/epilogue, bf16 store.
    Single K step (no accumulator scratch) -- BERT contractions fit one pass."""
    y = jnp.dot(x_ref[...], w_ref[...], preferred_element_type=jnp.float32)
    o_ref[...] = _apply_act(y + b_ref[...], act).astype(o_ref.dtype)


def dense(x, w, b, act=None, out_dtype=jnp.bfloat16, tm=512, tn=None):
    M, K = x.shape
    N = w.shape[1]
    tm = _pick_tile(M, tm, 8)
    tn = N if tn is None else _pick_tile(N, tn, 128)
    return pl.pallas_call(
        functools.partial(_dense_kernel, act=act),
        out_shape=jax.ShapeDtypeStruct((M, N), out_dtype),
        grid=(M // tm, N // tn),
        in_specs=[
            pl.BlockSpec((tm, K), lambda i, j: (i, 0)),
            pl.BlockSpec((K, tn), lambda i, j: (0, j)),
            pl.BlockSpec((1, tn), lambda i, j: (0, j)),
        ],
        out_specs=pl.BlockSpec((tm, tn), lambda i, j: (i, j)),
        compiler_params=_cparams(("parallel", "parallel")),
    )(x, w, b)


def _dense_add_ln_kernel(x_ref, w_ref, b_ref, r_ref, g_ref, bt_ref, o_ref, *, eps):
    """o = LayerNorm(x @ w + b + residual); single K pass, LN stats in f32."""
    h = jnp.dot(x_ref[...], w_ref[...], preferred_element_type=jnp.float32)
    h = h + b_ref[...] + r_ref[...].astype(jnp.float32)
    mu = jnp.mean(h, axis=-1, keepdims=True)
    var = jnp.mean((h - mu) * (h - mu), axis=-1, keepdims=True)
    o_ref[...] = ((h - mu) * jax.lax.rsqrt(var + eps) * g_ref[...]
                  + bt_ref[...]).astype(o_ref.dtype)


def dense_add_ln(x, w, b, residual, gamma, beta, eps=1e-12, tm=512):
    M, K = x.shape
    N = w.shape[1]                       # full N per row tile (needed for LN)
    tm = _pick_tile(M, tm, 8)
    return pl.pallas_call(
        functools.partial(_dense_add_ln_kernel, eps=eps),
        out_shape=jax.ShapeDtypeStruct((M, N), jnp.bfloat16),
        grid=(M // tm,),
        in_specs=[
            pl.BlockSpec((tm, K), lambda i: (i, 0)),
            pl.BlockSpec((K, N), lambda i: (0, 0)),
            pl.BlockSpec((1, N), lambda i: (0, 0)),
            pl.BlockSpec((tm, N), lambda i: (i, 0)),
            pl.BlockSpec((1, N), lambda i: (0, 0)),
            pl.BlockSpec((1, N), lambda i: (0, 0)),
        ],
        out_specs=pl.BlockSpec((tm, N), lambda i: (i, 0)),
        compiler_params=_cparams(("parallel",)),
    )(x, w, b, residual, gamma, beta)


def _ffn_kernel(x_ref, w1_ref, b1_ref, w2_ref, b2_ref, g_ref, bt_ref, o_ref,
                acc_ref, *, eps):
    """Fused FFN with F-tiling:
       acc += GELU(x @ w1[:, f] + b1[f]) @ w2[f, :]   (f = inner-dim tile)
       last f: o = LayerNorm(acc + b2 + x)   (x doubles as the residual)."""
    f = pl.program_id(1)

    @pl.when(f == 0)
    def _():
        acc_ref[...] = jnp.zeros_like(acc_ref)

    t = jnp.dot(x_ref[...], w1_ref[...],
                preferred_element_type=jnp.float32) + b1_ref[...]
    t = _apply_act(t, "gelu")
    acc_ref[...] += jnp.dot(t.astype(jnp.bfloat16), w2_ref[...],
                            preferred_element_type=jnp.float32)

    @pl.when(f == pl.num_programs(1) - 1)
    def _():
        h = acc_ref[...] + b2_ref[...] + x_ref[...].astype(jnp.float32)
        mu = jnp.mean(h, axis=-1, keepdims=True)
        var = jnp.mean((h - mu) * (h - mu), axis=-1, keepdims=True)
        o_ref[...] = ((h - mu) * jax.lax.rsqrt(var + eps) * g_ref[...]
                      + bt_ref[...]).astype(o_ref.dtype)


def ffn_add_ln(x, w1, b1, w2, b2, gamma, beta, eps=1e-12, tm=512, tf=512):
    M, H = x.shape
    F = w1.shape[1]
    tm = _pick_tile(M, tm, 8)
    tf = _pick_tile(F, tf, 128)
    return pl.pallas_call(
        functools.partial(_ffn_kernel, eps=eps),
        out_shape=jax.ShapeDtypeStruct((M, H), jnp.bfloat16),
        grid=(M // tm, F // tf),
        in_specs=[
            pl.BlockSpec((tm, H), lambda i, f: (i, 0)),    # x (also residual)
            pl.BlockSpec((H, tf), lambda i, f: (0, f)),
            pl.BlockSpec((1, tf), lambda i, f: (0, f)),
            pl.BlockSpec((tf, H), lambda i, f: (f, 0)),
            pl.BlockSpec((1, H), lambda i, f: (0, 0)),
            pl.BlockSpec((1, H), lambda i, f: (0, 0)),
            pl.BlockSpec((1, H), lambda i, f: (0, 0)),
        ],
        out_specs=pl.BlockSpec((tm, H), lambda i, f: (i, 0)),
        scratch_shapes=[pltpu.VMEM((tm, H), jnp.float32)],
        compiler_params=_cparams(("parallel", "arbitrary")),
    )(x, w1, b1, w2, b2, gamma, beta)


def _ln_kernel(x_ref, g_ref, b_ref, o_ref, *, eps):
    h = x_ref[...].astype(jnp.float32)
    mu = jnp.mean(h, axis=-1, keepdims=True)
    var = jnp.mean((h - mu) * (h - mu), axis=-1, keepdims=True)
    o_ref[...] = ((h - mu) * jax.lax.rsqrt(var + eps) * g_ref[...]
                  + b_ref[...]).astype(o_ref.dtype)


def layernorm(x, gamma, beta, eps=1e-12, tm=512):
    M, H = x.shape
    tm = _pick_tile(M, tm, 8)
    return pl.pallas_call(
        functools.partial(_ln_kernel, eps=eps),
        out_shape=jax.ShapeDtypeStruct((M, H), jnp.bfloat16),
        grid=(M // tm,),
        in_specs=[
            pl.BlockSpec((tm, H), lambda i: (i, 0)),
            pl.BlockSpec((1, H), lambda i: (0, 0)),
            pl.BlockSpec((1, H), lambda i: (0, 0)),
        ],
        out_specs=pl.BlockSpec((tm, H), lambda i: (i, 0)),
        compiler_params=_cparams(("parallel",)),
    )(x, gamma, beta)


def _attn_kernel(qkv_ref, m_ref, o_ref, *, n_heads, scale, tq):
    """One (batch, q-tile) per grid step.  The fused q|k|v slab stays in its
    lane-contiguous (S, 3H) layout; q rows are the dynamic tq-row window of
    this step, k/v and per-head columns are static slices.  Each head's
    context is stored before the next head starts (bounds vreg/VMEM liveness)."""
    H = o_ref.shape[2]
    Dh = H // n_heads
    q_start = pl.multiple_of(pl.program_id(1) * tq, tq)
    bias = m_ref[0]                                      # (1, S) additive mask
    q = qkv_ref[0, pl.ds(q_start, tq), 0:H]              # (tq, H) bf16
    k = qkv_ref[0, :, H:2 * H]                           # (S,  H) bf16
    v = qkv_ref[0, :, 2 * H:3 * H]                       # (S,  H) bf16
    for hidx in range(n_heads):
        lo = hidx * Dh
        qh = q[:, lo:lo + Dh]
        kh = k[:, lo:lo + Dh]
        vh = v[:, lo:lo + Dh]
        # q @ k^T without materializing a transpose (contract on last dims)
        s = jax.lax.dot_general(qh, kh, (((1,), (1,)), ((), ())),
                                preferred_element_type=jnp.float32) * scale
        s = s + bias
        s = s - jnp.max(s, axis=-1, keepdims=True)
        p = jnp.exp(s)
        p = p * pl.reciprocal(jnp.sum(p, axis=-1, keepdims=True), approx=True)
        ctx = jnp.dot(p.astype(jnp.bfloat16), vh,
                      preferred_element_type=jnp.float32)
        o_ref[0, :, lo:lo + Dh] = ctx.astype(o_ref.dtype)
    # TODO(synk): for long S, switch to a flash-style kv-tiled online softmax.


def attention(qkv, mask_bias, n_heads):
    """qkv: [B, S, 3H] (fused q|k|v on the lane axis); mask_bias: [B, 1, S]."""
    B, S, H3 = qkv.shape
    H = H3 // 3
    scale = 1.0 / math.sqrt(H // n_heads)
    tq = _pick_tile(S, 128, 8)
    return pl.pallas_call(
        functools.partial(_attn_kernel, n_heads=n_heads, scale=scale, tq=tq),
        out_shape=jax.ShapeDtypeStruct((B, S, H), jnp.bfloat16),
        grid=(B, S // tq),
        in_specs=[pl.BlockSpec((1, S, H3), lambda b, qi: (b, 0, 0)),
                  pl.BlockSpec((1, 1, S), lambda b, qi: (b, 0, 0))],
        out_specs=pl.BlockSpec((1, tq, H), lambda b, qi: (b, qi, 0)),
        compiler_params=_cparams(("parallel", "parallel")),
    )(qkv, mask_bias)


def _head_kernel(cls_ref, pw_ref, pb_ref, cw_ref, cb_ref, o_ref):
    """pooled = tanh(cls @ Wp + bp); logits = tanh(pooled @ Wc_pad + bc_pad)."""
    pooled = jnp.tanh(
        jnp.dot(cls_ref[...], pw_ref[...],
                preferred_element_type=jnp.float32) + pb_ref[...])
    o_ref[...] = jnp.tanh(
        jnp.dot(pooled.astype(jnp.bfloat16), cw_ref[...],
                preferred_element_type=jnp.float32) + cb_ref[...])


def classifier_head(cls, pool_w, pool_b, cls_w_pad, cls_b_pad):
    B, H = cls.shape
    NP = cls_w_pad.shape[1]            # lane-dense padded width (128)
    return pl.pallas_call(
        _head_kernel,
        out_shape=jax.ShapeDtypeStruct((B, NP), jnp.float32),
        grid=(1,),
        in_specs=[
            pl.BlockSpec((B, H), lambda i: (0, 0)),
            pl.BlockSpec((H, H), lambda i: (0, 0)),
            pl.BlockSpec((1, H), lambda i: (0, 0)),
            pl.BlockSpec((H, NP), lambda i: (0, 0)),
            pl.BlockSpec((1, NP), lambda i: (0, 0)),
        ],
        out_specs=pl.BlockSpec((B, NP), lambda i: (0, 0)),
        compiler_params=_cparams(("arbitrary",)),
    )(cls, pool_w, pool_b, cls_w_pad, cls_b_pad)


# ------------------------------ model (glue) -------------------------------- #

def init_params(key, *, vocab, max_pos, H, ffn, layers):
    keys = jax.random.split(key, 8 + layers)

    def w(k, shape, scale=0.02, dtype=jnp.bfloat16):
        return (scale * jax.random.normal(k, shape)).astype(dtype)

    cls_w = w(keys[4], (H, 1), dtype=jnp.float32)           # nn.Linear(768,1)
    cls_w_pad = jnp.zeros((H, 128), jnp.float32).at[:, :1].set(cls_w)

    params = {
        "word_emb": w(keys[0], (vocab, H), dtype=jnp.float32),
        "pos_emb": w(keys[1], (max_pos, H), dtype=jnp.float32),
        "type_emb": w(keys[2], (2, H), dtype=jnp.float32),
        "emb_ln_g": jnp.ones((1, H), jnp.float32),
        "emb_ln_b": jnp.zeros((1, H), jnp.float32),
        "pool_w": w(keys[3], (H, H)),
        "pool_b": jnp.zeros((1, H), jnp.float32),
        "cls_w_pad": cls_w_pad.astype(jnp.bfloat16),         # lane-dense head
        "cls_b_pad": jnp.zeros((1, 128), jnp.float32),
        "layers": [],
    }
    for li in range(layers):
        lk = jax.random.split(keys[8 + li], 6)
        wq, wk, wv = w(lk[0], (H, H)), w(lk[1], (H, H)), w(lk[2], (H, H))
        params["layers"].append({
            "w_qkv": jnp.concatenate([wq, wk, wv], axis=1),   # fused QKV (H,3H)
            "b_qkv": jnp.zeros((1, 3 * H), jnp.float32),
            "wo": w(lk[3], (H, H)), "bo": jnp.zeros((1, H), jnp.float32),
            "ln1_g": jnp.ones((1, H), jnp.float32),
            "ln1_b": jnp.zeros((1, H), jnp.float32),
            "w1": w(lk[4], (H, ffn)), "b1": jnp.zeros((1, ffn), jnp.float32),
            "w2": w(lk[5], (ffn, H)), "b2": jnp.zeros((1, H), jnp.float32),
            "ln2_g": jnp.ones((1, H), jnp.float32),
            "ln2_b": jnp.zeros((1, H), jnp.float32),
        })
    return params


def bert_classifier_forward(params, input_ids, mask, *, n_heads):
    B, S = input_ids.shape
    H = params["word_emb"].shape[1]

    # --- embeddings (gather is plain-JAX glue; LN is a Pallas kernel) ---
    we = params["word_emb"][input_ids]                       # [B,S,H]
    pe = params["pos_emb"][:S][None, :, :]                   # [1,S,H]
    te = params["type_emb"][0][None, None, :]                # token-type 0
    emb = (we + pe + te).reshape(B * S, H)
    h = layernorm(emb, params["emb_ln_g"], params["emb_ln_b"])        # bf16

    # additive attention-mask bias: 0 where mask==1, -1e9 where mask==0
    mask_bias = ((1.0 - mask.astype(jnp.float32)) * -1e9)[:, None, :]  # [B,1,S]

    for layer in params["layers"]:
        # --- self attention: fused QKV dense, slab handed to attention as-is ---
        qkv = dense(h, layer["w_qkv"], layer["b_qkv"])       # [B*S, 3H] bf16
        ctx = attention(qkv.reshape(B, S, 3 * H), mask_bias, n_heads)  # [B,S,H]
        h = dense_add_ln(ctx.reshape(B * S, H), layer["wo"], layer["bo"],
                         h, layer["ln1_g"], layer["ln1_b"])
        # --- fused feed forward (F-tiled) + residual + LayerNorm ---
        h = ffn_add_ln(h, layer["w1"], layer["b1"], layer["w2"], layer["b2"],
                       layer["ln2_g"], layer["ln2_b"])

    # --- pooled [CLS] -> dropout (identity, eval) -> Linear(H,1) -> tanh ---
    cls = h.reshape(B, S, H)[:, 0, :]                        # [B,H]
    logits_padded = classifier_head(cls, params["pool_w"], params["pool_b"],
                                    params["cls_w_pad"], params["cls_b_pad"])
    return logits_padded[:, :1]                              # [B,1] f32


# ----------------------------------- main ----------------------------------- #

if __name__ == "__main__":
    B, S = 2, 8
    H, N_HEADS, FFN, LAYERS, VOCAB, MAX_POS = 32, 4, 64, 2, 50, 64

    key = jax.random.PRNGKey(0)
    k_params, k_ids = jax.random.split(key)
    params = init_params(k_params, vocab=VOCAB, max_pos=MAX_POS,
                         H=H, ffn=FFN, layers=LAYERS)

    input_ids = jax.random.randint(k_ids, (B, S), 0, VOCAB, dtype=jnp.int32)
    mask = jnp.ones((B, S), jnp.int32).at[1, 6:].set(0)   # pad last 2 tokens of row 1

    fwd = jax.jit(functools.partial(bert_classifier_forward, n_heads=N_HEADS))
    out = fwd(params, input_ids, mask)
    out = jax.block_until_ready(out)
    assert out.shape == (B, 1) and out.dtype == jnp.float32
    assert bool(jnp.all(jnp.isfinite(out)))
    print("KERNEL_OK")
</pallas_src>

<mosaic_0001>
module attributes {stable_mosaic.version = 11 : i64} {
  func.func @_dense_kernel(%arg0: i32, %arg1: i32, %arg2: memref<16x32xbf16, #tpu.memory_space<vmem>>, %arg3: memref<32x96xbf16, #tpu.memory_space<vmem>>, %arg4: memref<1x96xf32, #tpu.memory_space<vmem>>, %arg5: memref<16x96xbf16, #tpu.memory_space<vmem>>) attributes {dimension_semantics = [#tpu.dimension_semantics<parallel>, #tpu.dimension_semantics<parallel>], iteration_bounds = array<i64: 1, 1>, scalar_prefetch = 0 : i64, scratch_operands = 0 : i64, tpu.core_type = #tpu.core_type<tc>, window_params = [{transform_indices = @transform_0, window_bounds = array<i64: 16, 32>}, {transform_indices = @transform_1, window_bounds = array<i64: 32, 96>}, {transform_indices = @transform_2, window_bounds = array<i64: 1, 96>}, {transform_indices = @transform_3, window_bounds = array<i64: 16, 96>}]} {
    %c0 = arith.constant 0 : index
    %c0_0 = arith.constant 0 : index
    %0 = vector.load %arg2[%c0, %c0_0] : memref<16x32xbf16, #tpu.memory_space<vmem>>, vector<16x32xbf16>
    %c0_1 = arith.constant 0 : index
    %c0_2 = arith.constant 0 : index
    %1 = vector.load %arg3[%c0_1, %c0_2] : memref<32x96xbf16, #tpu.memory_space<vmem>>, vector<32x96xbf16>
    %cst = arith.constant dense<0.000000e+00> : vector<16x96xf32>
    %2 = tpu.matmul %0, %1, %cst {dimension_numbers = #tpu.dot_dimension_numbers<[1], [0], [0], [1], [0, 0, 1, 1], [], []>} : vector<16x32xbf16>, vector<32x96xbf16>, vector<16x96xf32> -> vector<16x96xf32>
    %c0_3 = arith.constant 0 : index
    %c0_4 = arith.constant 0 : index
    %3 = vector.load %arg4[%c0_3, %c0_4] : memref<1x96xf32, #tpu.memory_space<vmem>>, vector<1x96xf32>
    %4 = vector.broadcast %3 : vector<1x96xf32> to vector<16x96xf32>
    %5 = arith.addf %2, %4 : vector<16x96xf32>
    %6 = arith.truncf %5 : vector<16x96xf32> to vector<16x96xbf16>
    %c0_5 = arith.constant 0 : index
    %c0_6 = arith.constant 0 : index
    %7 = vector.load %arg5[%c0_5, %c0_6] : memref<16x96xbf16, #tpu.memory_space<vmem>>, vector<16x96xbf16>
    tpu.vector_store %arg5[%c0_5, %c0_6], %6 {strides = array<i32>} : memref<16x96xbf16, #tpu.memory_space<vmem>>, vector<16x96xbf16>,
    return
  }
  func.func @transform_0(%arg0: i32, %arg1: i32) -> (i32, i32) {
    %c0_i32 = arith.constant 0 : i32
    %c0_i32_0 = arith.constant 0 : i32
    return %arg0, %c0_i32 : i32, i32
  }
  func.func @transform_1(%arg0: i32, %arg1: i32) -> (i32, i32) {
    %c0_i32 = arith.constant 0 : i32
    %c0_i32_0 = arith.constant 0 : i32
    return %c0_i32, %arg1 : i32, i32
  }
  func.func @transform_2(%arg0: i32, %arg1: i32) -> (i32, i32) {
    %c0_i32 = arith.constant 0 : i32
    %c0_i32_0 = arith.constant 0 : i32
    return %c0_i32, %arg1 : i32, i32
  }
  func.func @transform_3(%arg0: i32, %arg1: i32) -> (i32, i32) {
    %c0_i32 = arith.constant 0 : i32
    return %arg0, %arg1 : i32, i32
  }
}

module attributes {stable_mosaic.version = 11 : i64} {
  func.func @_attn_kernel(%arg0: i32, %arg1: i32, %arg2: memref<1x8x96xbf16, #tpu.memory_space<vmem>>, %arg3: memref<1x1x8xf32, #tpu.memory_space<vmem>>, %arg4: memref<1x8x32xbf16, #tpu.memory_space<vmem>>) attributes {dimension_semantics = [#tpu.dimension_semantics<parallel>, #tpu.dimension_semantics<parallel>], iteration_bounds = array<i64: 2, 1>, scalar_prefetch = 0 : i64, scratch_operands = 0 : i64, tpu.core_type = #tpu.core_type<tc>, window_params = [{transform_indices = @transform_0, window_bounds = array<i64: 1, 8, 96>}, {transform_indices = @transform_1, window_bounds = array<i64: 1, 1, 8>}, {transform_indices = @transform_2, window_bounds = array<i64: 1, 8, 32>}]} {
    %c8_i32 = arith.constant 8 : i32
    %0 = arith.muli %arg1, %c8_i32 : i32
    %1 = tpu.assume_multiple %0, 8 : i32
    %c0 = arith.constant 0 : index
    %c0_0 = arith.constant 0 : index
    %c0_1 = arith.constant 0 : index
    %2 = vector.load %arg3[%c0, %c0_0, %c0_1] : memref<1x1x8xf32, #tpu.memory_space<vmem>>, vector<1x1x8xf32>
    %3 = vector.shape_cast %2 : vector<1x1x8xf32> to vector<1x8xf32>
    %c0_2 = arith.constant 0 : index
    %4 = arith.index_cast %1 : i32 to index
    %c0_3 = arith.constant 0 : index
    %5 = vector.load %arg2[%c0_2, %4, %c0_3] : memref<1x8x96xbf16, #tpu.memory_space<vmem>>, vector<1x8x32xbf16>
    %6 = vector.shape_cast %5 : vector<1x8x32xbf16> to vector<8x32xbf16>
    %c0_4 = arith.constant 0 : index
    %c0_5 = arith.constant 0 : index
    %c32 = arith.constant 32 : index
    %7 = vector.load %arg2[%c0_4, %c0_5, %c32] : memref<1x8x96xbf16, #tpu.memory_space<vmem>>, vector<1x8x32xbf16>
    %8 = vector.shape_cast %7 : vector<1x8x32xbf16> to vector<8x32xbf16>
    %c0_6 = arith.constant 0 : index
    %c0_7 = arith.constant 0 : index
    %c64 = arith.constant 64 : index
    %9 = vector.load %arg2[%c0_6, %c0_7, %c64] : memref<1x8x96xbf16, #tpu.memory_space<vmem>>, vector<1x8x32xbf16>
    %10 = vector.shape_cast %9 : vector<1x8x32xbf16> to vector<8x32xbf16>
    %11 = vector.extract_strided_slice %6 {offsets = [0, 0], sizes = [8, 8], strides = [1, 1]} : vector<8x32xbf16> to vector<8x8xbf16>
    %12 = vector.extract_strided_slice %8 {offsets = [0, 0], sizes = [8, 8], strides = [1, 1]} : vector<8x32xbf16> to vector<8x8xbf16>
    %13 = vector.extract_strided_slice %10 {offsets = [0, 0], sizes = [8, 8], strides = [1, 1]} : vector<8x32xbf16> to vector<8x8xbf16>
    %cst = arith.constant dense<0.000000e+00> : vector<8x8xf32>
    %14 = tpu.matmul %11, %12, %cst {dimension_numbers = #tpu.dot_dimension_numbers<[1], [1], [0], [0], [0, 0, 1, 0], [], []>} : vector<8x8xbf16>, vector<8x8xbf16>, vector<8x8xf32> -> vector<8x8xf32>
    %cst_8 = arith.constant 0.353553385 : f32
    %15 = vector.broadcast %cst_8 : f32 to vector<8x8xf32>
    %16 = arith.mulf %14, %15 : vector<8x8xf32>
    %17 = vector.broadcast %3 : vector<1x8xf32> to vector<8x8xf32>
    %18 = arith.addf %16, %17 : vector<8x8xf32>
    %cst_9 = arith.constant dense<0xFF800000> : vector<8xf32>
    %19 = vector.multi_reduction <maximumf>, %18, %cst_9 [1] : vector<8x8xf32> to vector<8xf32>
    %20 = vector.shape_cast %19 : vector<8xf32> to vector<8x1xf32>
    %21 = vector.broadcast %20 : vector<8x1xf32> to vector<8x8xf32>
    %22 = arith.subf %18, %21 : vector<8x8xf32>
    %23 = math.exp %22 : vector<8x8xf32>
    %cst_10 = arith.constant dense<0.000000e+00> : vector<8xf32>
    %24 = vector.multi_reduction <add>, %23, %cst_10 [1] : vector<8x8xf32> to vector<8xf32>
    %25 = vector.shape_cast %24 : vector<8xf32> to vector<8x1xf32>
    %26 = tpu.reciprocal %25 {approx = true} : vector<8x1xf32> -> vector<8x1xf32>
    %27 = vector.broadcast %26 : vector<8x1xf32> to vector<8x8xf32>
    %28 = arith.mulf %23, %27 : vector<8x8xf32>
    %29 = arith.truncf %28 : vector<8x8xf32> to vector<8x8xbf16>
    %cst_11 = arith.constant dense<0.000000e+00> : vector<8x8xf32>
    %30 = tpu.matmul %29, %13, %cst_11 {dimension_numbers = #tpu.dot_dimension_numbers<[1], [0], [0], [1], [0, 0, 1, 1], [], []>} : vector<8x8xbf16>, vector<8x8xbf16>, vector<8x8xf32> -> vector<8x8xf32>
    %31 = arith.truncf %30 : vector<8x8xf32> to vector<8x8xbf16>
    %c0_12 = arith.constant 0 : index
    %c0_13 = arith.constant 0 : index
    %c0_14 = arith.constant 0 : index
    %32 = vector.load %arg4[%c0_12, %c0_13, %c0_14] : memref<1x8x32xbf16, #tpu.memory_space<vmem>>, vector<1x8x8xbf16>
    %33 = vector.shape_cast %32 : vector<1x8x8xbf16> to vector<8x8xbf16>
    %34 = vector.shape_cast %31 : vector<8x8xbf16> to vector<1x8x8xbf16>
    tpu.vector_store %arg4[%c0_12, %c0_13, %c0_14], %34 {strides = array<i32>} : memref<1x8x32xbf16, #tpu.memory_space<vmem>>, vector<1x8x8xbf16>,
    %35 = vector.extract_strided_slice %6 {offsets = [0, 8], sizes = [8, 8], strides = [1, 1]} : vector<8x32xbf16> to vector<8x8xbf16>
    %36 = vector.extract_strided_slice %8 {offsets = [0, 8], sizes = [8, 8], strides = [1, 1]} : vector<8x32xbf16> to vector<8x8xbf16>
    %37 = vector.extract_strided_slice %10 {offsets = [0, 8], sizes = [8, 8], strides = [1, 1]} : vector<8x32xbf16> to vector<8x8xbf16>
    %cst_15 = arith.constant dense<0.000000e+00> : vector<8x8xf32>
    %38 = tpu.matmul %35, %36, %cst_15 {dimension_numbers = #tpu.dot_dimension_numbers<[1], [1], [0], [0], [0, 0, 1, 0], [], []>} : vector<8x8xbf16>, vector<8x8xbf16>, vector<8x8xf32> -> vector<8x8xf32>
    %cst_16 = arith.constant 0.353553385 : f32
    %39 = vector.broadcast %cst_16 : f32 to vector<8x8xf32>
    %40 = arith.mulf %38, %39 : vector<8x8xf32>
    %41 = vector.broadcast %3 : vector<1x8xf32> to vector<8x8xf32>
    %42 = arith.addf %40, %41 : vector<8x8xf32>
    %cst_17 = arith.constant dense<0xFF800000> : vector<8xf32>
    %43 = vector.multi_reduction <maximumf>, %42, %cst_17 [1] : vector<8x8xf32> to vector<8xf32>
    %44 = vector.shape_cast %43 : vector<8xf32> to vector<8x1xf32>
    %45 = vector.broadcast %44 : vector<8x1xf32> to vector<8x8xf32>
    %46 = arith.subf %42, %45 : vector<8x8xf32>
    %47 = math.exp %46 : vector<8x8xf32>
    %cst_18 = arith.constant dense<0.000000e+00> : vector<8xf32>
    %48 = vector.multi_reduction <add>, %47, %cst_18 [1] : vector<8x8xf32> to vector<8xf32>
    %49 = vector.shape_cast %48 : vector<8xf32> to vector<8x1xf32>
    %50 = tpu.reciprocal %49 {approx = true} : vector<8x1xf32> -> vector<8x1xf32>
    %51 = vector.broadcast %50 : vector<8x1xf32> to vector<8x8xf32>
    %52 = arith.mulf %47, %51 : vector<8x8xf32>
    %53 = arith.truncf %52 : vector<8x8xf32> to vector<8x8xbf16>
    %cst_19 = arith.constant dense<0.000000e+00> : vector<8x8xf32>
    %54 = tpu.matmul %53, %37, %cst_19 {dimension_numbers = #tpu.dot_dimension_numbers<[1], [0], [0], [1], [0, 0, 1, 1], [], []>} : vector<8x8xbf16>, vector<8x8xbf16>, vector<8x8xf32> -> vector<8x8xf32>
    %55 = arith.truncf %54 : vector<8x8xf32> to vector<8x8xbf16>
    %c0_20 = arith.constant 0 : index
    %c0_21 = arith.constant 0 : index
    %c8 = arith.constant 8 : index
    %56 = vector.load %arg4[%c0_20, %c0_21, %c8] : memref<1x8x32xbf16, #tpu.memory_space<vmem>>, vector<1x8x8xbf16>
    %57 = vector.shape_cast %56 : vector<1x8x8xbf16> to vector<8x8xbf16>
    %58 = vector.shape_cast %55 : vector<8x8xbf16> to vector<1x8x8xbf16>
    tpu.vector_store %arg4[%c0_20, %c0_21, %c8], %58 {strides = array<i32>} : memref<1x8x32xbf16, #tpu.memory_space<vmem>>, vector<1x8x8xbf16>,
    %59 = vector.extract_strided_slice %6 {offsets = [0, 16], sizes = [8, 8], strides = [1, 1]} : vector<8x32xbf16> to vector<8x8xbf16>
    %60 = vector.extract_strided_slice %8 {offsets = [0, 16], sizes = [8, 8], strides = [1, 1]} : vector<8x32xbf16> to vector<8x8xbf16>
    %61 = vector.extract_strided_slice %10 {offsets = [0, 16], sizes = [8, 8], strides = [1, 1]} : vector<8x32xbf16> to vector<8x8xbf16>
    %cst_22 = arith.constant dense<0.000000e+00> : vector<8x8xf32>
    %62 = tpu.matmul %59, %60, %cst_22 {dimension_numbers = #tpu.dot_dimension_numbers<[1], [1], [0], [0], [0, 0, 1, 0], [], []>} : vector<8x8xbf16>, vector<8x8xbf16>, vector<8x8xf32> -> vector<8x8xf32>
    %cst_23 = arith.constant 0.353553385 : f32
    %63 = vector.broadcast %cst_23 : f32 to vector<8x8xf32>
    %64 = arith.mulf %62, %63 : vector<8x8xf32>
    %65 = vector.broadcast %3 : vector<1x8xf32> to vector<8x8xf32>
    %66 = arith.addf %64, %65 : vector<8x8xf32>
    %cst_24 = arith.constant dense<0xFF800000> : vector<8xf32>
    %67 = vector.multi_reduction <maximumf>, %66, %cst_24 [1] : vector<8x8xf32> to vector<8xf32>
    %68 = vector.shape_cast %67 : vector<8xf32> to vector<8x1xf32>
    %69 = vector.broadcast %68 : vector<8x1xf32> to vector<8x8xf32>
    %70 = arith.subf %66, %69 : vector<8x8xf32>
    %71 = math.exp %70 : vector<8x8xf32>
    %cst_25 = arith.constant dense<0.000000e+00> : vector<8xf32>
    %72 = vector.multi_reduction <add>, %71, %cst_25 [1] : vector<8x8xf32> to vector<8xf32>
    %73 = vector.shape_cast %72 : vector<8xf32> to vector<8x1xf32>
    %74 = tpu.reciprocal %73 {approx = true} : vector<8x1xf32> -> vector<8x1xf32>
    %75 = vector.broadcast %74 : vector<8x1xf32> to vector<8x8xf32>
    %76 = arith.mulf %71, %75 : vector<8x8xf32>
    %77 = arith.truncf %76 : vector<8x8xf32> to vector<8x8xbf16>
    %cst_26 = arith.constant dense<0.000000e+00> : vector<8x8xf32>
    %78 = tpu.matmul %77, %61, %cst_26 {dimension_numbers = #tpu.dot_dimension_numbers<[1], [0], [0], [1], [0, 0, 1, 1], [], []>} : vector<8x8xbf16>, vector<8x8xbf16>, vector<8x8xf32> -> vector<8x8xf32>
    %79 = arith.truncf %78 : vector<8x8xf32> to vector<8x8xbf16>
    %c0_27 = arith.constant 0 : index
    %c0_28 = arith.constant 0 : index
    %c16 = arith.constant 16 : index
    %80 = vector.load %arg4[%c0_27, %c0_28, %c16] : memref<1x8x32xbf16, #tpu.memory_space<vmem>>, vector<1x8x8xbf16>
    %81 = vector.shape_cast %80 : vector<1x8x8xbf16> to vector<8x8xbf16>
    %82 = vector.shape_cast %79 : vector<8x8xbf16> to vector<1x8x8xbf16>
    tpu.vector_store %arg4[%c0_27, %c0_28, %c16], %82 {strides = array<i32>} : memref<1x8x32xbf16, #tpu.memory_space<vmem>>, vector<1x8x8xbf16>,
    %83 = vector.extract_strided_slice %6 {offsets = [0, 24], sizes = [8, 8], strides = [1, 1]} : vector<8x32xbf16> to vector<8x8xbf16>
    %84 = vector.extract_strided_slice %8 {offsets = [0, 24], sizes = [8, 8], strides = [1, 1]} : vector<8x32xbf16> to vector<8x8xbf16>
    %85 = vector.extract_strided_slice %10 {offsets = [0, 24], sizes = [8, 8], strides = [1, 1]} : vector<8x32xbf16> to vector<8x8xbf16>
    %cst_29 = arith.constant dense<0.000000e+00> : vector<8x8xf32>
    %86 = tpu.matmul %83, %84, %cst_29 {dimension_numbers = #tpu.dot_dimension_numbers<[1], [1], [0], [0], [0, 0, 1, 0], [], []>} : vector<8x8xbf16>, vector<8x8xbf16>, vector<8x8xf32> -> vector<8x8xf32>
    %cst_30 = arith.constant 0.353553385 : f32
    %87 = vector.broadcast %cst_30 : f32 to vector<8x8xf32>
    %88 = arith.mulf %86, %87 : vector<8x8xf32>
    %89 = vector.broadcast %3 : vector<1x8xf32> to vector<8x8xf32>
    %90 = arith.addf %88, %89 : vector<8x8xf32>
    %cst_31 = arith.constant dense<0xFF800000> : vector<8xf32>
    %91 = vector.multi_reduction <maximumf>, %90, %cst_31 [1] : vector<8x8xf32> to vector<8xf32>
    %92 = vector.shape_cast %91 : vector<8xf32> to vector<8x1xf32>
    %93 = vector.broadcast %92 : vector<8x1xf32> to vector<8x8xf32>
    %94 = arith.subf %90, %93 : vector<8x8xf32>
    %95 = math.exp %94 : vector<8x8xf32>
    %cst_32 = arith.constant dense<0.000000e+00> : vector<8xf32>
    %96 = vector.multi_reduction <add>, %95, %cst_32 [1] : vector<8x8xf32> to vector<8xf32>
    %97 = vector.shape_cast %96 : vector<8xf32> to vector<8x1xf32>
    %98 = tpu.reciprocal %97 {approx = true} : vector<8x1xf32> -> vector<8x1xf32>
    %99 = vector.broadcast %98 : vector<8x1xf32> to vector<8x8xf32>
    %100 = arith.mulf %95, %99 : vector<8x8xf32>
    %101 = arith.truncf %100 : vector<8x8xf32> to vector<8x8xbf16>
    %cst_33 = arith.constant dense<0.000000e+00> : vector<8x8xf32>
    %102 = tpu.matmul %101, %85, %cst_33 {dimension_numbers = #tpu.dot_dimension_numbers<[1], [0], [0], [1], [0, 0, 1, 1], [], []>} : vector<8x8xbf16>, vector<8x8xbf16>, vector<8x8xf32> -> vector<8x8xf32>
    %103 = arith.truncf %102 : vector<8x8xf32> to vector<8x8xbf16>
    %c0_34 = arith.constant 0 : index
    %c0_35 = arith.constant 0 : index
    %c24 = arith.constant 24 : index
    %104 = vector.load %arg4[%c0_34, %c0_35, %c24] : memref<1x8x32xbf16, #tpu.memory_space<vmem>>, vector<1x8x8xbf16>
    %105 = vector.shape_cast %104 : vector<1x8x8xbf16> to vector<8x8xbf16>
    %106 = vector.shape_cast %103 : vector<8x8xbf16> to vector<1x8x8xbf16>
    tpu.vector_store %arg4[%c0_34, %c0_35, %c24], %106 {strides = array<i32>} : memref<1x8x32xbf16, #tpu.memory_space<vmem>>, vector<1x8x8xbf16>,
    return
  }
  func.func @transform_0(%arg0: i32, %arg1: i32) -> (i32, i32, i32) {
    %c0_i32 = arith.constant 0 : i32
    %c0_i32_0 = arith.constant 0 : i32
    %c0_i32_1 = arith.constant 0 : i32
    return %arg0, %c0_i32, %c0_i32_0 : i32, i32, i32
  }
  func.func @transform_1(%arg0: i32, %arg1: i32) -> (i32, i32, i32) {
    %c0_i32 = arith.constant 0 : i32
    %c0_i32_0 = arith.constant 0 : i32
    %c0_i32_1 = arith.constant 0 : i32
    return %arg0, %c0_i32, %c0_i32_0 : i32, i32, i32
  }
  func.func @transform_2(%arg0: i32, %arg1: i32) -> (i32, i32, i32) {
    %c0_i32 = arith.constant 0 : i32
    %c0_i32_0 = arith.constant 0 : i32
    return %arg0, %arg1, %c0_i32 : i32, i32, i32
  }
}

module attributes {stable_mosaic.version = 11 : i64} {
  func.func @_ln_kernel(%arg0: i32, %arg1: memref<16x32xf32, #tpu.memory_space<vmem>>, %arg2: memref<1x32xf32, #tpu.memory_space<vmem>>, %arg3: memref<1x32xf32, #tpu.memory_space<vmem>>, %arg4: memref<16x32xbf16, #tpu.memory_space<vmem>>) attributes {dimension_semantics = [#tpu.dimension_semantics<parallel>], iteration_bounds = array<i64: 1>, scalar_prefetch = 0 : i64, scratch_operands = 0 : i64, tpu.core_type = #tpu.core_type<tc>, window_params = [{transform_indices = @transform_0, window_bounds = array<i64: 16, 32>}, {pipeline_mode = #tpu.pipeline_mode<synchronous>, transform_indices = @transform_1, window_bounds = array<i64: 1, 32>}, {pipeline_mode = #tpu.pipeline_mode<synchronous>, transform_indices = @transform_2, window_bounds = array<i64: 1, 32>}, {transform_indices = @transform_3, window_bounds = array<i64: 16, 32>}]} {
    %c0 = arith.constant 0 : index
    %c0_0 = arith.constant 0 : index
    %0 = vector.load %arg1[%c0, %c0_0] : memref<16x32xf32, #tpu.memory_space<vmem>>, vector<16x32xf32>
    %cst = arith.constant dense<0.000000e+00> : vector<16xf32>
    %1 = vector.multi_reduction <add>, %0, %cst [1] : vector<16x32xf32> to vector<16xf32>
    %2 = vector.shape_cast %1 : vector<16xf32> to vector<16x1xf32>
    %cst_1 = arith.constant 3.200000e+01 : f32
    %3 = vector.broadcast %cst_1 : f32 to vector<16x1xf32>
    %4 = arith.divf %2, %3 : vector<16x1xf32>
    %5 = vector.broadcast %4 : vector<16x1xf32> to vector<16x32xf32>
    %6 = arith.subf %0, %5 : vector<16x32xf32>
    %7 = vector.broadcast %4 : vector<16x1xf32> to vector<16x32xf32>
    %8 = arith.subf %0, %7 : vector<16x32xf32>
    %9 = arith.mulf %6, %8 : vector<16x32xf32>
    %cst_2 = arith.constant dense<0.000000e+00> : vector<16xf32>
    %10 = vector.multi_reduction <add>, %9, %cst_2 [1] : vector<16x32xf32> to vector<16xf32>
    %11 = vector.shape_cast %10 : vector<16xf32> to vector<16x1xf32>
    %cst_3 = arith.constant 3.200000e+01 : f32
    %12 = vector.broadcast %cst_3 : f32 to vector<16x1xf32>
    %13 = arith.divf %11, %12 : vector<16x1xf32>
    %14 = vector.broadcast %4 : vector<16x1xf32> to vector<16x32xf32>
    %15 = arith.subf %0, %14 : vector<16x32xf32>
    %cst_4 = arith.constant 9.99999996E-13 : f32
    %16 = vector.broadcast %cst_4 : f32 to vector<16x1xf32>
    %17 = arith.addf %13, %16 : vector<16x1xf32>
    %18 = math.rsqrt %17 : vector<16x1xf32>
    %19 = vector.broadcast %18 : vector<16x1xf32> to vector<16x32xf32>
    %20 = arith.mulf %15, %19 : vector<16x32xf32>
    %c0_5 = arith.constant 0 : index
    %c0_6 = arith.constant 0 : index
    %21 = vector.load %arg2[%c0_5, %c0_6] : memref<1x32xf32, #tpu.memory_space<vmem>>, vector<1x32xf32>
    %22 = vector.broadcast %21 : vector<1x32xf32> to vector<16x32xf32>
    %23 = arith.mulf %20, %22 : vector<16x32xf32>
    %c0_7 = arith.constant 0 : index
    %c0_8 = arith.constant 0 : index
    %24 = vector.load %arg3[%c0_7, %c0_8] : memref<1x32xf32, #tpu.memory_space<vmem>>, vector<1x32xf32>
    %25 = vector.broadcast %24 : vector<1x32xf32> to vector<16x32xf32>
    %26 = arith.addf %23, %25 : vector<16x32xf32>
    %27 = arith.truncf %26 : vector<16x32xf32> to vector<16x32xbf16>
    %c0_9 = arith.constant 0 : index
    %c0_10 = arith.constant 0 : index
    %28 = vector.load %arg4[%c0_9, %c0_10] : memref<16x32xbf16, #tpu.memory_space<vmem>>, vector<16x32xbf16>
    tpu.vector_store %arg4[%c0_9, %c0_10], %27 {strides = array<i32>} : memref<16x32xbf16, #tpu.memory_space<vmem>>, vector<16x32xbf16>,
    return
  }
  func.func @transform_0(%arg0: i32) -> (i32, i32) {
    %c0_i32 = arith.constant 0 : i32
    %c0_i32_0 = arith.constant 0 : i32
    return %arg0, %c0_i32 : i32, i32
  }
  func.func @transform_1(%arg0: i32) -> (i32, i32) {
    %c0_i32 = arith.constant 0 : i32
    %c0_i32_0 = arith.constant 0 : i32
    %c0_i32_1 = arith.constant 0 : i32
    return %c0_i32, %c0_i32_0 : i32, i32
  }
  func.func @transform_2(%arg0: i32) -> (i32, i32) {
    %c0_i32 = arith.constant 0 : i32
    %c0_i32_0 = arith.constant 0 : i32
    %c0_i32_1 = arith.constant 0 : i32
    return %c0_i32, %c0_i32_0 : i32, i32
  }
  func.func @transform_3(%arg0: i32) -> (i32, i32) {
    %c0_i32 = arith.constant 0 : i32
    %c0_i32_0 = arith.constant 0 : i32
    return %arg0, %c0_i32 : i32, i32
  }
}

module attributes {stable_mosaic.version = 11 : i64} {
  func.func @_dense_add_ln_kernel(%arg0: i32, %arg1: memref<16x32xbf16, #tpu.memory_space<vmem>>, %arg2: memref<32x32xbf16, #tpu.memory_space<vmem>>, %arg3: memref<1x32xf32, #tpu.memory_space<vmem>>, %arg4: memref<16x32xbf16, #tpu.memory_space<vmem>>, %arg5: memref<1x32xf32, #tpu.memory_space<vmem>>, %arg6: memref<1x32xf32, #tpu.memory_space<vmem>>, %arg7: memref<16x32xbf16, #tpu.memory_space<vmem>>) attributes {dimension_semantics = [#tpu.dimension_semantics<parallel>], iteration_bounds = array<i64: 1>, scalar_prefetch = 0 : i64, scratch_operands = 0 : i64, tpu.core_type = #tpu.core_type<tc>, window_params = [{transform_indices = @transform_0, window_bounds = array<i64: 16, 32>}, {pipeline_mode = #tpu.pipeline_mode<synchronous>, transform_indices = @transform_1, window_bounds = array<i64: 32, 32>}, {pipeline_mode = #tpu.pipeline_mode<synchronous>, transform_indices = @transform_2, window_bounds = array<i64: 1, 32>}, {transform_indices = @transform_3, window_bounds = array<i64: 16, 32>}, {pipeline_mode = #tpu.pipeline_mode<synchronous>, transform_indices = @transform_4, window_bounds = array<i64: 1, 32>}, {pipeline_mode = #tpu.pipeline_mode<synchronous>, transform_indices = @transform_5, window_bounds = array<i64: 1, 32>}, {transform_indices = @transform_6, window_bounds = array<i64: 16, 32>}]} {
    %c0 = arith.constant 0 : index
    %c0_0 = arith.constant 0 : index
    %0 = vector.load %arg1[%c0, %c0_0] : memref<16x32xbf16, #tpu.memory_space<vmem>>, vector<16x32xbf16>
    %c0_1 = arith.constant 0 : index
    %c0_2 = arith.constant 0 : index
    %1 = vector.load %arg2[%c0_1, %c0_2] : memref<32x32xbf16, #tpu.memory_space<vmem>>, vector<32x32xbf16>
    %cst = arith.constant dense<0.000000e+00> : vector<16x32xf32>
    %2 = tpu.matmul %0, %1, %cst {dimension_numbers = #tpu.dot_dimension_numbers<[1], [0], [0], [1], [0, 0, 1, 1], [], []>} : vector<16x32xbf16>, vector<32x32xbf16>, vector<16x32xf32> -> vector<16x32xf32>
    %c0_3 = arith.constant 0 : index
    %c0_4 = arith.constant 0 : index
    %3 = vector.load %arg3[%c0_3, %c0_4] : memref<1x32xf32, #tpu.memory_space<vmem>>, vector<1x32xf32>
    %4 = vector.broadcast %3 : vector<1x32xf32> to vector<16x32xf32>
    %5 = arith.addf %2, %4 : vector<16x32xf32>
    %c0_5 = arith.constant 0 : index
    %c0_6 = arith.constant 0 : index
    %6 = vector.load %arg4[%c0_5, %c0_6] : memref<16x32xbf16, #tpu.memory_space<vmem>>, vector<16x32xbf16>
    %7 = arith.extf %6 : vector<16x32xbf16> to vector<16x32xf32>
    %8 = arith.addf %5, %7 : vector<16x32xf32>
    %cst_7 = arith.constant dense<0.000000e+00> : vector<16xf32>
    %9 = vector.multi_reduction <add>, %8, %cst_7 [1] : vector<16x32xf32> to vector<16xf32>
    %10 = vector.shape_cast %9 : vector<16xf32> to vector<16x1xf32>
    %cst_8 = arith.constant 3.200000e+01 : f32
    %11 = vector.broadcast %cst_8 : f32 to vector<16x1xf32>
    %12 = arith.divf %10, %11 : vector<16x1xf32>
    %13 = vector.broadcast %12 : vector<16x1xf32> to vector<16x32xf32>
    %14 = arith.subf %8, %13 : vector<16x32xf32>
    %15 = vector.broadcast %12 : vector<16x1xf32> to vector<16x32xf32>
    %16 = arith.subf %8, %15 : vector<16x32xf32>
    %17 = arith.mulf %14, %16 : vector<16x32xf32>
    %cst_9 = arith.constant dense<0.000000e+00> : vector<16xf32>
    %18 = vector.multi_reduction <add>, %17, %cst_9 [1] : vector<16x32xf32> to vector<16xf32>
    %19 = vector.shape_cast %18 : vector<16xf32> to vector<16x1xf32>
    %cst_10 = arith.constant 3.200000e+01 : f32
    %20 = vector.broadcast %cst_10 : f32 to vector<16x1xf32>
    %21 = arith.divf %19, %20 : vector<16x1xf32>
    %22 = vector.broadcast %12 : vector<16x1xf32> to vector<16x32xf32>
    %23 = arith.subf %8, %22 : vector<16x32xf32>
    %cst_11 = arith.constant 9.99999996E-13 : f32
    %24 = vector.broadcast %cst_11 : f32 to vector<16x1xf32>
    %25 = arith.addf %21, %24 : vector<16x1xf32>
    %26 = math.rsqrt %25 : vector<16x1xf32>
    %27 = vector.broadcast %26 : vector<16x1xf32> to vector<16x32xf32>
    %28 = arith.mulf %23, %27 : vector<16x32xf32>
    %c0_12 = arith.constant 0 : index
    %c0_13 = arith.constant 0 : index
    %29 = vector.load %arg5[%c0_12, %c0_13] : memref<1x32xf32, #tpu.memory_space<vmem>>, vector<1x32xf32>
    %30 = vector.broadcast %29 : vector<1x32xf32> to vector<16x32xf32>
    %31 = arith.mulf %28, %30 : vector<16x32xf32>
    %c0_14 = arith.constant 0 : index
    %c0_15 = arith.constant 0 : index
    %32 = vector.load %arg6[%c0_14, %c0_15] : memref<1x32xf32, #tpu.memory_space<vmem>>, vector<1x32xf32>
    %33 = vector.broadcast %32 : vector<1x32xf32> to vector<16x32xf32>
    %34 = arith.addf %31, %33 : vector<16x32xf32>
    %35 = arith.truncf %34 : vector<16x32xf32> to vector<16x32xbf16>
    %c0_16 = arith.constant 0 : index
    %c0_17 = arith.constant 0 : index
    %36 = vector.load %arg7[%c0_16, %c0_17] : memref<16x32xbf16, #tpu.memory_space<vmem>>, vector<16x32xbf16>
    tpu.vector_store %arg7[%c0_16, %c0_17], %35 {strides = array<i32>} : memref<16x32xbf16, #tpu.memory_space<vmem>>, vector<16x32xbf16>,
    return
  }
  func.func @transform_0(%arg0: i32) -> (i32, i32) {
    %c0_i32 = arith.constant 0 : i32
    %c0_i32_0 = arith.constant 0 : i32
    return %arg0, %c0_i32 : i32, i32
  }
  func.func @transform_1(%arg0: i32) -> (i32, i32) {
    %c0_i32 = arith.constant 0 : i32
    %c0_i32_0 = arith.constant 0 : i32
    %c0_i32_1 = arith.constant 0 : i32
    return %c0_i32, %c0_i32_0 : i32, i32
  }
  func.func @transform_2(%arg0: i32) -> (i32, i32) {
    %c0_i32 = arith.constant 0 : i32
    %c0_i32_0 = arith.constant 0 : i32
    %c0_i32_1 = arith.constant 0 : i32
    return %c0_i32, %c0_i32_0 : i32, i32
  }
  func.func @transform_3(%arg0: i32) -> (i32, i32) {
    %c0_i32 = arith.constant 0 : i32
    %c0_i32_0 = arith.constant 0 : i32
    return %arg0, %c0_i32 : i32, i32
  }
  func.func @transform_4(%arg0: i32) -> (i32, i32) {
    %c0_i32 = arith.constant 0 : i32
    %c0_i32_0 = arith.constant 0 : i32
    %c0_i32_1 = arith.constant 0 : i32
    return %c0_i32, %c0_i32_0 : i32, i32
  }
  func.func @transform_5(%arg0: i32) -> (i32, i32) {
    %c0_i32 = arith.constant 0 : i32
    %c0_i32_0 = arith.constant 0 : i32
    %c0_i32_1 = arith.constant 0 : i32
    return %c0_i32, %c0_i32_0 : i32, i32
  }
  func.func @transform_6(%arg0: i32) -> (i32, i32) {
    %c0_i32 = arith.constant 0 : i32
    %c0_i32_0 = arith.constant 0 : i32
    return %arg0, %c0_i32 : i32, i32
  }
}

module attributes {stable_mosaic.version = 11 : i64} {
  func.func @_head_kernel(%arg0: i32, %arg1: memref<2x32xbf16, #tpu.memory_space<vmem>>, %arg2: memref<32x32xbf16, #tpu.memory_space<vmem>>, %arg3: memref<1x32xf32, #tpu.memory_space<vmem>>, %arg4: memref<32x128xbf16, #tpu.memory_space<vmem>>, %arg5: memref<1x128xf32, #tpu.memory_space<vmem>>, %arg6: memref<2x128xf32, #tpu.memory_space<vmem>>) attributes {dimension_semantics = [#tpu.dimension_semantics<arbitrary>], iteration_bounds = array<i64: 1>, scalar_prefetch = 0 : i64, scratch_operands = 0 : i64, tpu.core_type = #tpu.core_type<tc>, window_params = [{pipeline_mode = #tpu.pipeline_mode<synchronous>, transform_indices = @transform_0, window_bounds = array<i64: 2, 32>}, {pipeline_mode = #tpu.pipeline_mode<synchronous>, transform_indices = @transform_1, window_bounds = array<i64: 32, 32>}, {pipeline_mode = #tpu.pipeline_mode<synchronous>, transform_indices = @transform_2, window_bounds = array<i64: 1, 32>}, {pipeline_mode = #tpu.pipeline_mode<synchronous>, transform_indices = @transform_3, window_bounds = array<i64: 32, 128>}, {pipeline_mode = #tpu.pipeline_mode<synchronous>, transform_indices = @transform_4, window_bounds = array<i64: 1, 128>}, {pipeline_mode = #tpu.pipeline_mode<synchronous>, transform_indices = @transform_5, window_bounds = array<i64: 2, 128>}]} {
    %c0 = arith.constant 0 : index
    %c0_0 = arith.constant 0 : index
    %0 = vector.load %arg1[%c0, %c0_0] : memref<2x32xbf16, #tpu.memory_space<vmem>>, vector<2x32xbf16>
    %c0_1 = arith.constant 0 : index
    %c0_2 = arith.constant 0 : index
    %1 = vector.load %arg2[%c0_1, %c0_2] : memref<32x32xbf16, #tpu.memory_space<vmem>>, vector<32x32xbf16>
    %cst = arith.constant dense<0.000000e+00> : vector<2x32xf32>
    %2 = tpu.matmul %0, %1, %cst {dimension_numbers = #tpu.dot_dimension_numbers<[1], [0], [0], [1], [0, 0, 1, 1], [], []>} : vector<2x32xbf16>, vector<32x32xbf16>, vector<2x32xf32> -> vector<2x32xf32>
    %c0_3 = arith.constant 0 : index
    %c0_4 = arith.constant 0 : index
    %3 = vector.load %arg3[%c0_3, %c0_4] : memref<1x32xf32, #tpu.memory_space<vmem>>, vector<1x32xf32>
    %4 = vector.broadcast %3 : vector<1x32xf32> to vector<2x32xf32>
    %5 = arith.addf %2, %4 : vector<2x32xf32>
    %6 = math.tanh %5 : vector<2x32xf32>
    %7 = arith.truncf %6 : vector<2x32xf32> to vector<2x32xbf16>
    %c0_5 = arith.constant 0 : index
    %c0_6 = arith.constant 0 : index
    %8 = vector.load %arg4[%c0_5, %c0_6] : memref<32x128xbf16, #tpu.memory_space<vmem>>, vector<32x128xbf16>
    %cst_7 = arith.constant dense<0.000000e+00> : vector<2x128xf32>
    %9 = tpu.matmul %7, %8, %cst_7 {dimension_numbers = #tpu.dot_dimension_numbers<[1], [0], [0], [1], [0, 0, 1, 1], [], []>} : vector<2x32xbf16>, vector<32x128xbf16>, vector<2x128xf32> -> vector<2x128xf32>
    %c0_8 = arith.constant 0 : index
    %c0_9 = arith.constant 0 : index
    %10 = vector.load %arg5[%c0_8, %c0_9] : memref<1x128xf32, #tpu.memory_space<vmem>>, vector<1x128xf32>
    %11 = vector.broadcast %10 : vector<1x128xf32> to vector<2x128xf32>
    %12 = arith.addf %9, %11 : vector<2x128xf32>
    %13 = math.tanh %12 : vector<2x128xf32>
    %c0_10 = arith.constant 0 : index
    %c0_11 = arith.constant 0 : index
    %14 = vector.load %arg6[%c0_10, %c0_11] : memref<2x128xf32, #tpu.memory_space<vmem>>, vector<2x128xf32>
    tpu.vector_store %arg6[%c0_10, %c0_11], %13 {strides = array<i32>} : memref<2x128xf32, #tpu.memory_space<vmem>>, vector<2x128xf32>,
    return
  }
  func.func @transform_0(%arg0: i32) -> (i32, i32) {
    %c0_i32 = arith.constant 0 : i32
    %c0_i32_0 = arith.constant 0 : i32
    %c0_i32_1 = arith.constant 0 : i32
    return %c0_i32, %c0_i32_0 : i32, i32
  }
  func.func @transform_1(%arg0: i32) -> (i32, i32) {
    %c0_i32 = arith.constant 0 : i32
    %c0_i32_0 = arith.constant 0 : i32
    %c0_i32_1 = arith.constant 0 : i32
    return %c0_i32, %c0_i32_0 : i32, i32
  }
  func.func @transform_2(%arg0: i32) -> (i32, i32) {
    %c0_i32 = arith.constant 0 : i32
    %c0_i32_0 = arith.constant 0 : i32
    %c0_i32_1 = arith.constant 0 : i32
    return %c0_i32, %c0_i32_0 : i32, i32
  }
  func.func @transform_3(%arg0: i32) -> (i32, i32) {
    %c0_i32 = arith.constant 0 : i32
    %c0_i32_0 = arith.constant 0 : i32
    %c0_i32_1 = arith.constant 0 : i32
    return %c0_i32, %c0_i32_0 : i32, i32
  }
  func.func @transform_4(%arg0: i32) -> (i32, i32) {
    %c0_i32 = arith.constant 0 : i32
    %c0_i32_0 = arith.constant 0 : i32
    %c0_i32_1 = arith.constant 0 : i32
    return %c0_i32, %c0_i32_0 : i32, i32
  }
  func.func @transform_5(%arg0: i32) -> (i32, i32) {
    %c0_i32 = arith.constant 0 : i32
    %c0_i32_0 = arith.constant 0 : i32
    %c0_i32_1 = arith.constant 0 : i32
    return %c0_i32, %c0_i32_0 : i32, i32
  }
}

module attributes {stable_mosaic.version = 11 : i64} {
  func.func @_ffn_kernel(%arg0: i32, %arg1: i32, %arg2: memref<16x32xbf16, #tpu.memory_space<vmem>>, %arg3: memref<32x64xbf16, #tpu.memory_space<vmem>>, %arg4: memref<1x64xf32, #tpu.memory_space<vmem>>, %arg5: memref<64x32xbf16, #tpu.memory_space<vmem>>, %arg6: memref<1x32xf32, #tpu.memory_space<vmem>>, %arg7: memref<1x32xf32, #tpu.memory_space<vmem>>, %arg8: memref<1x32xf32, #tpu.memory_space<vmem>>, %arg9: memref<16x32xbf16, #tpu.memory_space<vmem>>, %arg10: memref<16x32xf32, #tpu.memory_space<vmem>>) attributes {dimension_semantics = [#tpu.dimension_semantics<parallel>, #tpu.dimension_semantics<arbitrary>], iteration_bounds = array<i64: 1, 1>, scalar_prefetch = 0 : i64, scratch_operands = 1 : i64, tpu.core_type = #tpu.core_type<tc>, window_params = [{transform_indices = @transform_0, window_bounds = array<i64: 16, 32>}, {transform_indices = @transform_1, window_bounds = array<i64: 32, 64>}, {transform_indices = @transform_2, window_bounds = array<i64: 1, 64>}, {transform_indices = @transform_3, window_bounds = array<i64: 64, 32>}, {pipeline_mode = #tpu.pipeline_mode<synchronous>, transform_indices = @transform_4, window_bounds = array<i64: 1, 32>}, {pipeline_mode = #tpu.pipeline_mode<synchronous>, transform_indices = @transform_5, window_bounds = array<i64: 1, 32>}, {pipeline_mode = #tpu.pipeline_mode<synchronous>, transform_indices = @transform_6, window_bounds = array<i64: 1, 32>}, {transform_indices = @transform_7, window_bounds = array<i64: 16, 32>}]} {
    %c0_i32 = arith.constant 0 : i32
    %0 = arith.cmpi eq, %arg1, %c0_i32 : i32
    %1 = arith.extui %0 : i1 to i32
    %c0_i32_0 = arith.constant 0 : i32
    %2 = arith.cmpi ne, %1, %c0_i32_0 : i32
    scf.if %2 {
      %cst_19 = arith.constant 0.000000e+00 : f32
      %31 = vector.broadcast %cst_19 : f32 to vector<16x32xf32>
      %c0_20 = arith.constant 0 : index
      %c0_21 = arith.constant 0 : index
      %32 = vector.load %arg10[%c0_20, %c0_21] : memref<16x32xf32, #tpu.memory_space<vmem>>, vector<16x32xf32>
      tpu.vector_store %arg10[%c0_20, %c0_21], %31 {strides = array<i32>} : memref<16x32xf32, #tpu.memory_space<vmem>>, vector<16x32xf32>,
    } else {
    }
    %c0 = arith.constant 0 : index
    %c0_1 = arith.constant 0 : index
    %3 = vector.load %arg2[%c0, %c0_1] : memref<16x32xbf16, #tpu.memory_space<vmem>>, vector<16x32xbf16>
    %c0_2 = arith.constant 0 : index
    %c0_3 = arith.constant 0 : index
    %4 = vector.load %arg3[%c0_2, %c0_3] : memref<32x64xbf16, #tpu.memory_space<vmem>>, vector<32x64xbf16>
    %cst = arith.constant dense<0.000000e+00> : vector<16x64xf32>
    %5 = tpu.matmul %3, %4, %cst {dimension_numbers = #tpu.dot_dimension_numbers<[1], [0], [0], [1], [0, 0, 1, 1], [], []>} : vector<16x32xbf16>, vector<32x64xbf16>, vector<16x64xf32> -> vector<16x64xf32>
    %c0_4 = arith.constant 0 : index
    %c0_5 = arith.constant 0 : index
    %6 = vector.load %arg4[%c0_4, %c0_5] : memref<1x64xf32, #tpu.memory_space<vmem>>, vector<1x64xf32>
    %7 = vector.broadcast %6 : vector<1x64xf32> to vector<16x64xf32>
    %8 = arith.addf %5, %7 : vector<16x64xf32>
    %cst_6 = arith.constant 5.000000e-01 : f32
    %9 = vector.broadcast %cst_6 : f32 to vector<16x64xf32>
    %10 = arith.mulf %9, %8 : vector<16x64xf32>
    %cst_7 = arith.constant 4.471500e-02 : f32
    %11 = vector.broadcast %cst_7 : f32 to vector<16x64xf32>
    %12 = arith.mulf %11, %8 : vector<16x64xf32>
    %13 = arith.mulf %12, %8 : vector<16x64xf32>
    %14 = arith.mulf %13, %8 : vector<16x64xf32>
    %15 = arith.addf %8, %14 : vector<16x64xf32>
    %cst_8 = arith.constant 0.797884583 : f32
    %16 = vector.broadcast %cst_8 : f32 to vector<16x64xf32>
    %17 = arith.mulf %16, %15 : vector<16x64xf32>
    %18 = math.tanh %17 : vector<16x64xf32>
    %cst_9 = arith.constant 1.000000e+00 : f32
    %19 = vector.broadcast %cst_9 : f32 to vector<16x64xf32>
    %20 = arith.addf %19, %18 : vector<16x64xf32>
    %21 = arith.mulf %10, %20 : vector<16x64xf32>
    %c0_10 = arith.constant 0 : index
    %c0_11 = arith.constant 0 : index
    %22 = vector.load %arg10[%c0_10, %c0_11] : memref<16x32xf32, #tpu.memory_space<vmem>>, vector<16x32xf32>
    %23 = arith.truncf %21 : vector<16x64xf32> to vector<16x64xbf16>
    %c0_12 = arith.constant 0 : index
    %c0_13 = arith.constant 0 : index
    %24 = vector.load %arg5[%c0_12, %c0_13] : memref<64x32xbf16, #tpu.memory_space<vmem>>, vector<64x32xbf16>
    %cst_14 = arith.constant dense<0.000000e+00> : vector<16x32xf32>
    %25 = tpu.matmul %23, %24, %cst_14 {dimension_numbers = #tpu.dot_dimension_numbers<[1], [0], [0], [1], [0, 0, 1, 1], [], []>} : vector<16x64xbf16>, vector<64x32xbf16>, vector<16x32xf32> -> vector<16x32xf32>
    %26 = arith.addf %22, %25 : vector<16x32xf32>
    %c0_15 = arith.constant 0 : index
    %c0_16 = arith.constant 0 : index
    %27 = vector.load %arg10[%c0_15, %c0_16] : memref<16x32xf32, #tpu.memory_space<vmem>>, vector<16x32xf32>
    tpu.vector_store %arg10[%c0_15, %c0_16], %26 {strides = array<i32>} : memref<16x32xf32, #tpu.memory_space<vmem>>, vector<16x32xf32>,
    %c0_i32_17 = arith.constant 0 : i32
    %28 = arith.cmpi eq, %arg1, %c0_i32_17 : i32
    %29 = arith.extui %28 : i1 to i32
    %c0_i32_18 = arith.constant 0 : i32
    %30 = arith.cmpi ne, %29, %c0_i32_18 : i32
    scf.if %30 {
      %c0_19 = arith.constant 0 : index
      %c0_20 = arith.constant 0 : index
      %31 = vector.load %arg10[%c0_19, %c0_20] : memref<16x32xf32, #tpu.memory_space<vmem>>, vector<16x32xf32>
      %c0_21 = arith.constant 0 : index
      %c0_22 = arith.constant 0 : index
      %32 = vector.load %arg6[%c0_21, %c0_22] : memref<1x32xf32, #tpu.memory_space<vmem>>, vector<1x32xf32>
      %33 = vector.broadcast %32 : vector<1x32xf32> to vector<16x32xf32>
      %34 = arith.addf %31, %33 : vector<16x32xf32>
      %c0_23 = arith.constant 0 : index
      %c0_24 = arith.constant 0 : index
      %35 = vector.load %arg2[%c0_23, %c0_24] : memref<16x32xbf16, #tpu.memory_space<vmem>>, vector<16x32xbf16>
      %36 = arith.extf %35 : vector<16x32xbf16> to vector<16x32xf32>
      %37 = arith.addf %34, %36 : vector<16x32xf32>
      %cst_25 = arith.constant dense<0.000000e+00> : vector<16xf32>
      %38 = vector.multi_reduction <add>, %37, %cst_25 [1] : vector<16x32xf32> to vector<16xf32>
      %39 = vector.shape_cast %38 : vector<16xf32> to vector<16x1xf32>
      %cst_26 = arith.constant 3.200000e+01 : f32
      %40 = vector.broadcast %cst_26 : f32 to vector<16x1xf32>
      %41 = arith.divf %39, %40 : vector<16x1xf32>
      %42 = vector.broadcast %41 : vector<16x1xf32> to vector<16x32xf32>
      %43 = arith.subf %37, %42 : vector<16x32xf32>
      %44 = vector.broadcast %41 : vector<16x1xf32> to vector<16x32xf32>
      %45 = arith.subf %37, %44 : vector<16x32xf32>
      %46 = arith.mulf %43, %45 : vector<16x32xf32>
      %cst_27 = arith.constant dense<0.000000e+00> : vector<16xf32>
      %47 = vector.multi_reduction <add>, %46, %cst_27 [1] : vector<16x32xf32> to vector<16xf32>
      %48 = vector.shape_cast %47 : vector<16xf32> to vector<16x1xf32>
      %cst_28 = arith.constant 3.200000e+01 : f32
      %49 = vector.broadcast %cst_28 : f32 to vector<16x1xf32>
      %50 = arith.divf %48, %49 : vector<16x1xf32>
      %51 = vector.broadcast %41 : vector<16x1xf32> to vector<16x32xf32>
      %52 = arith.subf %37, %51 : vector<16x32xf32>
      %cst_29 = arith.constant 9.99999996E-13 : f32
      %53 = vector.broadcast %cst_29 : f32 to vector<16x1xf32>
      %54 = arith.addf %50, %53 : vector<16x1xf32>
      %55 = math.rsqrt %54 : vector<16x1xf32>
      %56 = vector.broadcast %55 : vector<16x1xf32> to vector<16x32xf32>
      %57 = arith.mulf %52, %56 : vector<16x32xf32>
      %c0_30 = arith.constant 0 : index
      %c0_31 = arith.constant 0 : index
      %58 = vector.load %arg7[%c0_30, %c0_31] : memref<1x32xf32, #tpu.memory_space<vmem>>, vector<1x32xf32>
      %59 = vector.broadcast %58 : vector<1x32xf32> to vector<16x32xf32>
      %60 = arith.mulf %57, %59 : vector<16x32xf32>
      %c0_32 = arith.constant 0 : index
      %c0_33 = arith.constant 0 : index
      %61 = vector.load %arg8[%c0_32, %c0_33] : memref<1x32xf32, #tpu.memory_space<vmem>>, vector<1x32xf32>
      %62 = vector.broadcast %61 : vector<1x32xf32> to vector<16x32xf32>
      %63 = arith.addf %60, %62 : vector<16x32xf32>
      %64 = arith.truncf %63 : vector<16x32xf32> to vector<16x32xbf16>
      %c0_34 = arith.constant 0 : index
      %c0_35 = arith.constant 0 : index
      %65 = vector.load %arg9[%c0_34, %c0_35] : memref<16x32xbf16, #tpu.memory_space<vmem>>, vector<16x32xbf16>
      tpu.vector_store %arg9[%c0_34, %c0_35], %64 {strides = array<i32>} : memref<16x32xbf16, #tpu.memory_space<vmem>>, vector<16x32xbf16>,
    } else {
    }
    return
  }
  func.func @transform_0(%arg0: i32, %arg1: i32) -> (i32, i32) {
    %c0_i32 = arith.constant 0 : i32
    %c0_i32_0 = arith.constant 0 : i32
    return %arg0, %c0_i32 : i32, i32
  }
  func.func @transform_1(%arg0: i32, %arg1: i32) -> (i32, i32) {
    %c0_i32 = arith.constant 0 : i32
    %c0_i32_0 = arith.constant 0 : i32
    return %c0_i32, %arg1 : i32, i32
  }
  func.func @transform_2(%arg0: i32, %arg1: i32) -> (i32, i32) {
    %c0_i32 = arith.constant 0 : i32
    %c0_i32_0 = arith.constant 0 : i32
    return %c0_i32, %arg1 : i32, i32
  }
  func.func @transform_3(%arg0: i32, %arg1: i32) -> (i32, i32) {
    %c0_i32 = arith.constant 0 : i32
    %c0_i32_0 = arith.constant 0 : i32
    return %arg1, %c0_i32 : i32, i32
  }
  func.func @transform_4(%arg0: i32, %arg1: i32) -> (i32, i32) {
    %c0_i32 = arith.constant 0 : i32
    %c0_i32_0 = arith.constant 0 : i32
    %c0_i32_1 = arith.constant 0 : i32
    return %c0_i32, %c0_i32_0 : i32, i32
  }
  func.func @transform_5(%arg0: i32, %arg1: i32) -> (i32, i32) {
    %c0_i32 = arith.constant 0 : i32
    %c0_i32_0 = arith.constant 0 : i32
    %c0_i32_1 = arith.constant 0 : i32
    return %c0_i32, %c0_i32_0 : i32, i32
  }
  func.func @transform_6(%arg0: i32, %arg1: i32) -> (i32, i32) {
    %c0_i32 = arith.constant 0 : i32
    %c0_i32_0 = arith.constant 0 : i32
    %c0_i32_1 = arith.constant 0 : i32
    return %c0_i32, %c0_i32_0 : i32, i32
  }
  func.func @transform_7(%arg0: i32, %arg1: i32) -> (i32, i32) {
    %c0_i32 = arith.constant 0 : i32
    %c0_i32_0 = arith.constant 0 : i32
    return %arg0, %c0_i32 : i32, i32
  }
}

</mosaic_0001>

<llo_original>
// kernel: bert_classifier_forward.11
$region0: #{bert_classifier_forward.11}
  #allocation0 [shape = 'u32[]', space=smem, size = 0x4, offset = 0x4, fixed_abs, tag = 'smem constant byte address 0x4 - core index']
  #allocation1 [shape = 'u32[72,128]{1,0:T(1,128)}', space=vmem, size = 0x9000, scoped, tag = 'internal scratch']
  %s0 = inlined_call_operand.vmem [shape: bf16[16,32], index: 0, kind: input, shape index: {}]
  %s1 = inlined_call_operand.vmem [shape: bf16[32,96], index: 1, kind: input, shape index: {}]
  %s2 = inlined_call_operand.vmem [shape: f32[1,96], index: 2, kind: input, shape index: {}]
  %s3 = inlined_call_operand.vmem [shape: bf16[16,96], index: 3, kind: output, shape index: {}]
  %s4 = sld [smem:[#allocation0]]
  $region22: #{bert_classifier_forward.11} parent=0
    _
  %s6 = ssub.s32 1, %s4
  %s7 = scalar_select 0, %s6, %s4
  // Predicated region
  $region2: #{bert_classifier_forward.11} parent=0 // pred_check
    _
  $region3: #{bert_classifier_forward.11} parent=0 // pred_check_branch
    %9 = sbr.rel (0) target = $region5
  $region4: #{bert_classifier_forward.11} parent=0 // pred_region
    _
  $region5: #{bert_classifier_forward.11} parent=0 // pred_fallthru
    _
  // Predicated region
  $region6: #{bert_classifier_forward.11} parent=0 // pred_check
    _
  $region7: #{bert_classifier_forward.11} parent=0 // pred_check_branch
    %11 = sbr.rel (0) target = $region9
  $region8: #{bert_classifier_forward.11} parent=0 // pred_region
    _
  $region9: #{bert_classifier_forward.11} parent=0 // pred_fallthru
    _
  // Predicated region
  $region10: #{bert_classifier_forward.11} parent=0 // pred_check
    _
  $region11: #{bert_classifier_forward.11} parent=0 // pred_check_branch
    %13 = sbr.rel (0) target = $region13
  $region12: #{bert_classifier_forward.11} parent=0 // pred_region
    _
  $region13: #{bert_classifier_forward.11} parent=0 // pred_fallthru
    _
  %v15 = vld [vmem:[%s0] sm:$0xf]
  %v16 = vld [vmem:[%s0 + $0x4] sm:$0xf]
  %v17 = vld [vmem:[%s1] sm:$0xf]
  %v18 = vld [vmem:[%s1 + $0x4] sm:$0xf]
  %v19 = vld [vmem:[%s1 + $0x8] sm:$0xf]
  %v20 = vld [vmem:[%s1 + $0xc] sm:$0xf]
  %v21 = vld [vmem:[%s2] sm:$0x1]
  %v23 = vperm.slane %v21, 0
  %v27 = vunpack.c.l.b16 %v15
  %v28 = vunpack.c.l.b16 %v16
  %v29 = vpack.c.b16 %v28, %v27
  %v34 = vunpack.c.l.b16 %v17
  %v35 = vunpack.c.l.b16 %v18
  %v36 = vunpack.c.l.b16 %v19
  %v37 = vunpack.c.l.b16 %v20
  %v38 = vpack.c.b16 %v35, %v34
  %v39 = vpack.c.b16 %v37, %v36
  %vm42 = vcmask 261120
  %v44 = vsel %vm42, %v29, 0
  %46 = vmatpush.bf16.msra.mxu0 0
  %47 = vmatpush.bf16.msra.mxu0 0
  %48 = vmatpush.bf16.msra.mxu0 0
  %49 = vmatpush.bf16.msra.mxu0 0
  %50 = vmatpush.bf16.msra.mxu0 0
  %51 = vmatpush.bf16.msra.mxu0 0
  %52 = vmatpush.bf16.msra.mxu0 %v39
  %53 = vmatpush.bf16.msra.mxu0 %v38
  %54 = vmatmul.bf16.gmra.mxu0 %v44
  %v55 = vpop.f32.mrf.mxu0
  %v56 = vadd.f32 %v23, %v55
  %v57 = vpop.f32.mrf.mxu0
  %v58 = vadd.f32 %v23, %v57
  %59 = vdwg.mxu0
  %v60 = vpack.c.bf16 %v56, %v56
  %v61 = vpack.c.bf16 %v58, %v58
  %vm62 = vcmask 781312
  %63 = vst.msk [vmem:[%s3] sm:$0xf] %vm62, %v60
  %64 = vst.msk [vmem:[%s3 + $0x4] sm:$0xf] %vm62, %v61
  // Predicated region
  $region14: #{bert_classifier_forward.11} parent=0 // pred_check
    _
  $region15: #{bert_classifier_forward.11} parent=0 // pred_check_branch
    %66 = sbr.rel (0) target = $region17
  $region16: #{bert_classifier_forward.11} parent=0 // pred_region
    _
  $region17: #{bert_classifier_forward.11} parent=0 // pred_fallthru
    _
  // Predicated region
  $region18: #{bert_classifier_forward.11} parent=0 // pred_check
    _
  $region19: #{bert_classifier_forward.11} parent=0 // pred_check_branch
    %68 = sbr.rel (0) target = $region21
  $region20: #{bert_classifier_forward.11} parent=0 // pred_region
    _
  $region21: #{bert_classifier_forward.11} parent=0 // pred_fallthru
    _

// kernel: bert_classifier_forward.13
$region0: #{bert_classifier_forward.13}
  #allocation0 [shape = 'u32[]', space=smem, size = 0x4, offset = 0x4, fixed_abs, tag = 'smem constant byte address 0x4 - core index']
  #allocation1 [shape = 'u32[72,128]{1,0:T(1,128)}', space=vmem, size = 0x9000, scoped, tag = 'internal scratch']
  %s0 = inlined_call_operand.vmem [shape: bf16[16,32], index: 0, kind: input, shape index: {}]
  %s1 = inlined_call_operand.vmem [shape: bf16[32,32], index: 1, kind: input, shape index: {}]
  %s2 = inlined_call_operand.vmem [shape: f32[1,32], index: 2, kind: input, shape index: {}]
  %s3 = inlined_call_operand.vmem [shape: bf16[16,32], index: 3, kind: input, shape index: {}]
  %s4 = inlined_call_operand.vmem [shape: f32[1,32], index: 4, kind: input, shape index: {}]
  %s5 = inlined_call_operand.vmem [shape: f32[1,32], index: 5, kind: input, shape index: {}]
  %s6 = inlined_call_operand.vmem [shape: bf16[16,32], index: 6, kind: output, shape index: {}]
  %s7 = sld [smem:[#allocation0]]
  $region34: #{bert_classifier_forward.13} parent=0
    _
  %s9 = ssub.s32 1, %s7
  %s10 = scalar_select 0, %s9, %s7
  // Predicated region
  $region2: #{bert_classifier_forward.13} parent=0 // pred_check
    _
  $region3: #{bert_classifier_forward.13} parent=0 // pred_check_branch
    %12 = sbr.rel (0) target = $region5
  $region4: #{bert_classifier_forward.13} parent=0 // pred_region
    _
  $region5: #{bert_classifier_forward.13} parent=0 // pred_fallthru
    _
  // Predicated region
  $region6: #{bert_classifier_forward.13} parent=0 // pred_check
    _
  $region7: #{bert_classifier_forward.13} parent=0 // pred_check_branch
    %14 = sbr.rel (0) target = $region9
  $region8: #{bert_classifier_forward.13} parent=0 // pred_region
    _
  $region9: #{bert_classifier_forward.13} parent=0 // pred_fallthru
    _
  // Predicated region
  $region10: #{bert_classifier_forward.13} parent=0 // pred_check
    _
  $region11: #{bert_classifier_forward.13} parent=0 // pred_check_branch
    %16 = sbr.rel (0) target = $region13
  $region12: #{bert_classifier_forward.13} parent=0 // pred_region
    _
  $region13: #{bert_classifier_forward.13} parent=0 // pred_fallthru
    _
  // Predicated region
  $region14: #{bert_classifier_forward.13} parent=0 // pred_check
    _
  $region15: #{bert_classifier_forward.13} parent=0 // pred_check_branch
    %18 = sbr.rel (0) target = $region17
  $region16: #{bert_classifier_forward.13} parent=0 // pred_region
    _
  $region17: #{bert_classifier_forward.13} parent=0 // pred_fallthru
    _
  // Predicated region
  $region18: #{bert_classifier_forward.13} parent=0 // pred_check
    _
  $region19: #{bert_classifier_forward.13} parent=0 // pred_check_branch
    %20 = sbr.rel (0) target = $region21
  $region20: #{bert_classifier_forward.13} parent=0 // pred_region
    _
  $region21: #{bert_classifier_forward.13} parent=0 // pred_fallthru
    _
  // Predicated region
  $region22: #{bert_classifier_forward.13} parent=0 // pred_check
    _
  $region23: #{bert_classifier_forward.13} parent=0 // pred_check_branch
    %22 = sbr.rel (0) target = $region25
  $region24: #{bert_classifier_forward.13} parent=0 // pred_region
    _
  $region25: #{bert_classifier_forward.13} parent=0 // pred_fallthru
    _
  %v24 = vld [vmem:[%s0] sm:$0xf]
  %v25 = vld [vmem:[%s0 + $0x4] sm:$0xf]
  %v26 = vld [vmem:[%s1] sm:$0xf]
  %v27 = vld [vmem:[%s1 + $0x4] sm:$0xf]
  %v28 = vld [vmem:[%s1 + $0x8] sm:$0xf]
  %v29 = vld [vmem:[%s1 + $0xc] sm:$0xf]
  %v30 = vld [vmem:[%s2] sm:$0x1]
  %v32 = vperm.slane %v30, 0
  %v36 = vunpack.c.l.b16 %v24
  %v37 = vunpack.c.l.b16 %v25
  %v38 = vpack.c.b16 %v37, %v36
  %v43 = vunpack.c.l.b16 %v26
  %v44 = vunpack.c.l.b16 %v27
  %v45 = vunpack.c.l.b16 %v28
  %v46 = vunpack.c.l.b16 %v29
  %v47 = vpack.c.b16 %v44, %v43
  %v48 = vpack.c.b16 %v46, %v45
  %vm51 = vcmask 261120
  %v53 = vsel %vm51, %v38, 0
  %55 = vmatpush.bf16.msra.mxu0 0
  %56 = vmatpush.bf16.msra.mxu0 0
  %57 = vmatpush.bf16.msra.mxu0 0
  %58 = vmatpush.bf16.msra.mxu0 0
  %59 = vmatpush.bf16.msra.mxu0 0
  %60 = vmatpush.bf16.msra.mxu0 0
  %61 = vmatpush.bf16.msra.mxu0 %v48
  %62 = vmatpush.bf16.msra.mxu0 %v47
  %63 = vmatmul.bf16.gmra.mxu0 %v53
  %v64 = vpop.f32.mrf.mxu0
  %v65 = vadd.f32 %v32, %v64
  %v66 = vpop.f32.mrf.mxu0
  %v67 = vadd.f32 %v32, %v66
  %68 = vdwg.mxu0
  %v69 = vld [vmem:[%s3] sm:$0xf]
  %v70 = vld [vmem:[%s3 + $0x4] sm:$0xf]
  %v71 = vunpack.c.l.bf16 %v69
  %v72 = vunpack.c.l.bf16 %v70
  %v73 = vadd.f32 %v65, %v71
  %v74 = vadd.f32 %v67, %v72
  %v75 = vsel %vm51, %v73, 0.0
  %76 = vadd.xlane.f32.xlu0 %v75
  %v77 = vpop.xlane.xlu0 %76
  %v78 = vsel %vm51, %v74, 0.0
  %79 = vadd.xlane.f32.xlu0 %v78
  %v80 = vpop.xlane.xlu0 %79
  %v81 = vrcp.pop 32.0
  %v82 = vmul.f32 32.0, %v81
  %v83 = vsub.f32 1.0, %v82
  %v84 = vmul.f32 %v81, %v83
  %v85 = vadd.f32 %v81, %v84
  %vm86 = vweird.f32 %v81
  %v87 = vsel %vm86, %v81, %v85
  %v88 = vmul.f32 %v77, %v87
  %v89 = vmul.f32 %v80, %v87
  %v90 = vsub.f32 %v73, %v88
  %v91 = vsub.f32 %v74, %v89
  %v92 = vmul.f32 %v90, %v90
  %v93 = vmul.f32 %v91, %v91
  %v94 = vsel %vm51, %v92, 0.0
  %95 = vadd.xlane.f32.xlu0 %v94
  %v96 = vpop.xlane.xlu0 %95
  %v97 = vsel %vm51, %v93, 0.0
  %98 = vadd.xlane.f32.xlu0 %v97
  %v99 = vpop.xlane.xlu0 %98
  %v100 = vmul.f32 %v96, %v87
  %v101 = vmul.f32 %v99, %v87
  %v102 = vadd.f32 %v100, 1e-12
  %v103 = vadd.f32 %v101, 1e-12
  %v104 = vrsqrt.pop %v102
  %v105 = vmul.f32 %v104, %v102
  %v106 = vmul.f32 %v105, %v104
  %v107 = vmul.f32 0.5, %v106
  %v108 = vsub.f32 1.5, %v107
  %v109 = vmul.f32 %v104, %v108
  %vm110 = vweird.f32 %v102
  %vm111 = vweird.f32 %v104
  %vm112 = vmor %vm110, %vm111
  %v113 = vsel %vm112, %v104, %v109
  %v114 = vrsqrt.pop %v103
  %v115 = vmul.f32 %v114, %v103
  %v116 = vmul.f32 %v115, %v114
  %v117 = vmul.f32 0.5, %v116
  %v118 = vsub.f32 1.5, %v117
  %v119 = vmul.f32 %v114, %v118
  %vm120 = vweird.f32 %v103
  %vm121 = vweird.f32 %v114
  %vm122 = vmor %vm120, %vm121
  %v123 = vsel %vm122, %v114, %v119
  %v124 = vmul.f32 %v90, %v113
  %v125 = vmul.f32 %v91, %v123
  %v126 = vld [vmem:[%s4] sm:$0x1]
  %v128 = vperm.slane %v126, 0
  %v130 = vmul.f32 %v124, %v128
  %v131 = vmul.f32 %v125, %v128
  %v132 = vld [vmem:[%s5] sm:$0x1]
  %v134 = vperm.slane %v132, 0
  %v136 = vadd.f32 %v130, %v134
  %v137 = vadd.f32 %v131, %v134
  %v138 = vpack.c.bf16 %v136, %v136
  %v139 = vpack.c.bf16 %v137, %v137
  %vm140 = vcmask 257024
  %141 = vst.msk [vmem:[%s6] sm:$0xf] %vm140, %v138
  %142 = vst.msk [vmem:[%s6 + $0x4] sm:$0xf] %vm140, %v139
  // Predicated region
  $region26: #{bert_classifier_forward.13} parent=0 // pred_check
    _
  $region27: #{bert_classifier_forward.13} parent=0 // pred_check_branch
    %144 = sbr.rel (0) target = $region29
  $region28: #{bert_classifier_forward.13} parent=0 // pred_region
    _
  $region29: #{bert_classifier_forward.13} parent=0 // pred_fallthru
    _
  // Predicated region
  $region30: #{bert_classifier_forward.13} parent=0 // pred_check
    _
  $region31: #{bert_classifier_forward.13} parent=0 // pred_check_branch
    %146 = sbr.rel (0) target = $region33
  $region32: #{bert_classifier_forward.13} parent=0 // pred_region
    _
  $region33: #{bert_classifier_forward.13} parent=0 // pred_fallthru
    _

// kernel: bert_classifier_forward.10
$region0: #{bert_classifier_forward.10}
  #allocation0 [shape = 'u32[]', space=smem, size = 0x4, offset = 0x4, fixed_abs, tag = 'smem constant byte address 0x4 - core index']
  #allocation1 [shape = 'u32[72,128]{1,0:T(1,128)}', space=vmem, size = 0x9000, scoped, tag = 'internal scratch']
  %s0 = inlined_call_operand.vmem [shape: f32[16,32], index: 0, kind: input, shape index: {}]
  %s1 = inlined_call_operand.vmem [shape: f32[1,32], index: 1, kind: input, shape index: {}]
  %s2 = inlined_call_operand.vmem [shape: f32[1,32], index: 2, kind: input, shape index: {}]
  %s3 = inlined_call_operand.vmem [shape: bf16[16,32], index: 3, kind: output, shape index: {}]
  %s4 = sld [smem:[#allocation0]]
  $region22: #{bert_classifier_forward.10} parent=0
    _
  %s6 = ssub.s32 1, %s4
  %s7 = scalar_select 0, %s6, %s4
  // Predicated region
  $region2: #{bert_classifier_forward.10} parent=0 // pred_check
    _
  $region3: #{bert_classifier_forward.10} parent=0 // pred_check_branch
    %9 = sbr.rel (0) target = $region5
  $region4: #{bert_classifier_forward.10} parent=0 // pred_region
    _
  $region5: #{bert_classifier_forward.10} parent=0 // pred_fallthru
    _
  // Predicated region
  $region6: #{bert_classifier_forward.10} parent=0 // pred_check
    _
  $region7: #{bert_classifier_forward.10} parent=0 // pred_check_branch
    %11 = sbr.rel (0) target = $region9
  $region8: #{bert_classifier_forward.10} parent=0 // pred_region
    _
  $region9: #{bert_classifier_forward.10} parent=0 // pred_fallthru
    _
  // Predicated region
  $region10: #{bert_classifier_forward.10} parent=0 // pred_check
    _
  $region11: #{bert_classifier_forward.10} parent=0 // pred_check_branch
    %13 = sbr.rel (0) target = $region13
  $region12: #{bert_classifier_forward.10} parent=0 // pred_region
    _
  $region13: #{bert_classifier_forward.10} parent=0 // pred_fallthru
    _
  %v14 = vld [vmem:[%s0] sm:$0xff]
  %v15 = vld [vmem:[%s0 + $0x8] sm:$0xff]
  %vm16 = vcmask 261120
  %v17 = vsel %vm16, %v14, 0.0
  %18 = vadd.xlane.f32.xlu0 %v17
  %v19 = vpop.xlane.xlu0 %18
  %v20 = vsel %vm16, %v15, 0.0
  %21 = vadd.xlane.f32.xlu0 %v20
  %v22 = vpop.xlane.xlu0 %21
  %v23 = vrcp.pop 32.0
  %v24 = vmul.f32 32.0, %v23
  %v25 = vsub.f32 1.0, %v24
  %v26 = vmul.f32 %v23, %v25
  %v27 = vadd.f32 %v23, %v26
  %vm28 = vweird.f32 %v23
  %v29 = vsel %vm28, %v23, %v27
  %v30 = vmul.f32 %v19, %v29
  %v31 = vmul.f32 %v22, %v29
  %v32 = vsub.f32 %v14, %v30
  %v33 = vsub.f32 %v15, %v31
  %v34 = vmul.f32 %v32, %v32
  %v35 = vmul.f32 %v33, %v33
  %v36 = vsel %vm16, %v34, 0.0
  %37 = vadd.xlane.f32.xlu0 %v36
  %v38 = vpop.xlane.xlu0 %37
  %v39 = vsel %vm16, %v35, 0.0
  %40 = vadd.xlane.f32.xlu0 %v39
  %v41 = vpop.xlane.xlu0 %40
  %v42 = vmul.f32 %v38, %v29
  %v43 = vmul.f32 %v41, %v29
  %v44 = vadd.f32 %v42, 1e-12
  %v45 = vadd.f32 %v43, 1e-12
  %v46 = vrsqrt.pop %v44
  %v47 = vmul.f32 %v46, %v44
  %v48 = vmul.f32 %v47, %v46
  %v49 = vmul.f32 0.5, %v48
  %v50 = vsub.f32 1.5, %v49
  %v51 = vmul.f32 %v46, %v50
  %vm52 = vweird.f32 %v44
  %vm53 = vweird.f32 %v46
  %vm54 = vmor %vm52, %vm53
  %v55 = vsel %vm54, %v46, %v51
  %v56 = vrsqrt.pop %v45
  %v57 = vmul.f32 %v56, %v45
  %v58 = vmul.f32 %v57, %v56
  %v59 = vmul.f32 0.5, %v58
  %v60 = vsub.f32 1.5, %v59
  %v61 = vmul.f32 %v56, %v60
  %vm62 = vweird.f32 %v45
  %vm63 = vweird.f32 %v56
  %vm64 = vmor %vm62, %vm63
  %v65 = vsel %vm64, %v56, %v61
  %v66 = vmul.f32 %v32, %v55
  %v67 = vmul.f32 %v33, %v65
  %v68 = vld [vmem:[%s1] sm:$0x1]
  %v70 = vperm.slane %v68, 0
  %v72 = vmul.f32 %v66, %v70
  %v73 = vmul.f32 %v67, %v70
  %v74 = vld [vmem:[%s2] sm:$0x1]
  %v76 = vperm.slane %v74, 0
  %v78 = vadd.f32 %v72, %v76
  %v79 = vadd.f32 %v73, %v76
  %v80 = vpack.c.bf16 %v78, %v78
  %v81 = vpack.c.bf16 %v79, %v79
  %vm82 = vcmask 257024
  %83 = vst.msk [vmem:[%s3] sm:$0xf] %vm82, %v80
  %84 = vst.msk [vmem:[%s3 + $0x4] sm:$0xf] %vm82, %v81
  // Predicated region
  $region14: #{bert_classifier_forward.10} parent=0 // pred_check
    _
  $region15: #{bert_classifier_forward.10} parent=0 // pred_check_branch
    %86 = sbr.rel (0) target = $region17
  $region16: #{bert_classifier_forward.10} parent=0 // pred_region
    _
  $region17: #{bert_classifier_forward.10} parent=0 // pred_fallthru
    _
  // Predicated region
  $region18: #{bert_classifier_forward.10} parent=0 // pred_check
    _
  $region19: #{bert_classifier_forward.10} parent=0 // pred_check_branch
    %88 = sbr.rel (0) target = $region21
  $region20: #{bert_classifier_forward.10} parent=0 // pred_region
    _
  $region21: #{bert_classifier_forward.10} parent=0 // pred_fallthru
    _

// kernel: bert_classifier_forward.12
$region0: #{bert_classifier_forward.12}
  #allocation0 [shape = 'u32[]', space=smem, size = 0x4, offset = 0x4, fixed_abs, tag = 'smem constant byte address 0x4 - core index']
  #allocation1 [shape = 'u32[72,128]{1,0:T(1,128)}', space=vmem, size = 0x9000, scoped, tag = 'internal scratch']
  %s0 = inlined_call_operand.vmem [shape: bf16[2,8,96], index: 0, kind: input, shape index: {}]
  %s1 = inlined_call_operand.vmem [shape: f32[2,1,8], index: 1, kind: input, shape index: {}]
  %s2 = inlined_call_operand.vmem [shape: bf16[2,8,32], index: 2, kind: output, shape index: {}]
  %s3 = sld [smem:[#allocation0]]
  $region41: #{bert_classifier_forward.12} parent=0
    _
  %s5 = ssub.s32 1, %s3
  %s6 = scalar_select 0, %s5, %s3
  loop: start=0, step=1, limit=4
  $region2: #{bert_classifier_forward.12} parent=0 // loop_pre_header
    _
  $region3: #{bert_classifier_forward.12} parent=0 // loop_header
    %s8 = sphi 0, %s12
    %p9 = scmp.ge.s32.totalorder %s8, 4
    %s15 = sphi 0, %s27
    %s16 = sphi 0, %s23
    %s17 = sphi 0, %s15
    %s18 = sphi 0, %s16
    %s19 = sphi 0, %s17
    %s20 = sphi 0, %s18
    %s30 = sphi 0, %s32
    %s33 = sphi 0, %s30
    %s34 = sphi 0, %s33
    %s50 = sphi 0, %s34
    %s56 = sphi 0, %s58
    %s59 = sphi 0, %s56
    %s60 = sphi 0, %s59
    %s76 = sphi 0, %s60
    %s84 = sphi 0, %s86
    %s87 = sphi 0, %s84
    %s88 = sphi 0, %s87
    %s104 = sphi 0, %s88
  $region4: #{bert_classifier_forward.12} parent=0 // loop_header_branch
    %11 = sbr.rel (%p9) target = $region8
  $region5: #{bert_classifier_forward.12} parent=0 // loop_body
    %s13 = ssub.s32 %s8, 1
    %s14 = ssub.s32 %s8, 2
    %s21 = sadd.s32 1, %s16
    %p22 = scmp.ge.s32.totalorder %s21, 1
    %s23 = scalar_select %p22, 0, %s21
    %s24 = sadd.s32 1, %s15
    %s25 = scalar_select %p22, %s24, %s15
    %p26 = scmp.ge.s32.totalorder %s25, 2
    %s27 = scalar_select %p26, 0, %s25
    %s28 = ssub.s32 %s15, %s27
    %p29 = scmp.eq.s32.totalorder %s28, 0
    %s31 = sadd.s32 %s30, 1
    %s32 = scalar_select %p29, %s30, %s31
    %p35 = pneg %p29
    %p36 = scmp.eq.s32.totalorder %s8, 1
    %p37 = por %p35, %p36
    %p38 = scmp.ne.s32.totalorder %s30, %s33
    %p39 = scmp.eq.s32.totalorder %s8, 0
    %p40 = por %p38, %p39
    %p41 = scmp.ne.s32.totalorder %s30, %s33
    %p42 = scmp.eq.s32.totalorder %s13, 1
    %p43 = por %p41, %p42
    %p44 = scmp.ne.s32.totalorder %s33, %s34
    %p45 = scmp.eq.s32.totalorder %s13, 0
    %p46 = por %p44, %p45
    %p47 = scmp.ne.s32.totalorder %s33, %s34
    %p48 = scmp.eq.s32.totalorder %s14, 1
    %p49 = por %p47, %p48
    %p51 = scmp.ne.s32.totalorder %s34, %s50
    %p52 = scmp.eq.s32.totalorder %s14, 0
    %p53 = por %p51, %p52
    %s54 = ssub.s32 %s15, %s27
    %p55 = scmp.eq.s32.totalorder %s54, 0
    %s57 = sadd.s32 %s56, 1
    %s58 = scalar_select %p55, %s56, %s57
    %p61 = pneg %p55
    %p62 = scmp.eq.s32.totalorder %s8, 1
    %p63 = por %p61, %p62
    %p64 = scmp.ne.s32.totalorder %s56, %s59
    %p65 = scmp.eq.s32.totalorder %s8, 0
    %p66 = por %p64, %p65
    %p67 = scmp.ne.s32.totalorder %s56, %s59
    %p68 = scmp.eq.s32.totalorder %s13, 1
    %p69 = por %p67, %p68
    %p70 = scmp.ne.s32.totalorder %s59, %s60
    %p71 = scmp.eq.s32.totalorder %s13, 0
    %p72 = por %p70, %p71
    %p73 = scmp.ne.s32.totalorder %s59, %s60
    %p74 = scmp.eq.s32.totalorder %s14, 1
    %p75 = por %p73, %p74
    %p77 = scmp.ne.s32.totalorder %s60, %s76
    %p78 = scmp.eq.s32.totalorder %s14, 0
    %p79 = por %p77, %p78
    %s80 = ssub.s32 %s15, %s27
    %s81 = ssub.s32 %s16, %s23
    %s82 = sor.u32 %s80, %s81
    %p83 = scmp.eq.s32.totalorder %s82, 0
    %s85 = sadd.s32 %s84, 1
    %s86 = scalar_select %p83, %s84, %s85
    %p89 = pneg %p83
    %p90 = scmp.eq.s32.totalorder %s8, 1
    %p91 = por %p89, %p90
    %p92 = scmp.ne.s32.totalorder %s84, %s87
    %p93 = scmp.eq.s32.totalorder %s8, 0
    %p94 = por %p92, %p93
    %p95 = scmp.ne.s32.totalorder %s84, %s87
    %p96 = scmp.eq.s32.totalorder %s13, 1
    %p97 = por %p95, %p96
    %p98 = scmp.ne.s32.totalorder %s87, %s88
    %p99 = scmp.eq.s32.totalorder %s13, 0
    %p100 = por %p98, %p99
    %p101 = scmp.ne.s32.totalorder %s87, %s88
    %p102 = scmp.eq.s32.totalorder %s14, 1
    %p103 = por %p101, %p102
    %p105 = scmp.ne.s32.totalorder %s88, %s104
    %p106 = scmp.eq.s32.totalorder %s14, 0
    %p107 = por %p105, %p106
    %p108 = scmp.le.s32.totalorder 1, %s8
    %p109 = scmp.lt.s32.totalorder %s8, 3
    %p110 = pnand %p108, %p109
    %p111 = pneg %p110
    // Predicated region
    $region9: #{bert_classifier_forward.12} parent=5 // pred_check
      _
    $region10: #{bert_classifier_forward.12} parent=5 // pred_check_branch
      %113 = sbr.rel (%p110) target = $region12
    $region11: #{bert_classifier_forward.12} parent=5 // pred_region
      %s114 = ssub.s32 %s8, 1
    $region12: #{bert_classifier_forward.12} parent=5 // pred_fallthru
      _
    %p115 = scmp.lt.s32.totalorder %s8, 2
    // Predicated region
    $region13: #{bert_classifier_forward.12} parent=5 // pred_check
      %p116 = pneg %p115
    $region14: #{bert_classifier_forward.12} parent=5 // pred_check_branch
      %118 = sbr.rel (%p116) target = $region16
    $region15: #{bert_classifier_forward.12} parent=5 // pred_region
      // Predicated region
      $region17: #{bert_classifier_forward.12} parent=15 // pred_check
        %p119 = pneg %p40
      $region18: #{bert_classifier_forward.12} parent=15 // pred_check_branch
        %121 = sbr.rel (%p119) target = $region20
      $region19: #{bert_classifier_forward.12} parent=15 // pred_region
        %p122 = scmp.lt.s32.totalorder %s15, 1
        %s123 = scalar_select %p122, %s15, 1
        %s124 = smul.addr %s123, 4
        %s125 = scalar_lea.vmem %s0, %s124
      $region20: #{bert_classifier_forward.12} parent=15 // pred_fallthru
        _
      // Predicated region
      $region21: #{bert_classifier_forward.12} parent=15 // pred_check
        %p126 = pneg %p66
      $region22: #{bert_classifier_forward.12} parent=15 // pred_check_branch
        %128 = sbr.rel (%p126) target = $region24
      $region23: #{bert_classifier_forward.12} parent=15 // pred_region
        %p129 = scmp.lt.s32.totalorder %s15, 1
        %s130 = scalar_select %p129, %s15, 1
        %s131 = scalar_lea.vmem %s1, %s130
      $region24: #{bert_classifier_forward.12} parent=15 // pred_fallthru
        _
    $region16: #{bert_classifier_forward.12} parent=5 // pred_fallthru
      _
    %p132 = scmp.le.s32.totalorder 1, %s8
    %p133 = scmp.lt.s32.totalorder %s8, 3
    %p134 = pnand %p132, %p133
    %p135 = pneg %p134
    // Predicated region
    $region25: #{bert_classifier_forward.12} parent=5 // pred_check
      _
    $region26: #{bert_classifier_forward.12} parent=5 // pred_check_branch
      %137 = sbr.rel (%p134) target = $region28
    $region27: #{bert_classifier_forward.12} parent=5 // pred_region
      %s138 = ssub.s32 %s8, 1
      %p139 = scmp.lt.s32.totalorder %s17, 1
      %s140 = scalar_select %p139, %s17, 1
      %s141 = smul.addr %s140, 4
      %s142 = scalar_lea.vmem %s0, %s141
      %p143 = pneg %p46
      %p144 = pneg %p43
      %p145 = scmp.lt.s32.totalorder %s17, 1
      %s146 = scalar_select %p145, %s17, 1
      %s147 = scalar_lea.vmem %s1, %s146
      %p148 = pneg %p72
      %p149 = pneg %p69
      %p150 = pneg %p100
      %p151 = pneg %p97
      %p152 = scmp.lt.s32.totalorder %s17, 1
      %s153 = scalar_select %p152, %s17, 1
      %p154 = scmp.lt.s32.totalorder %s18, 0
      %s155 = scalar_select %p154, %s18, 0
      %s156 = sadd.s32 %s155, %s153
      %s157 = smul.addr %s156, 4
      %s158 = scalar_lea.vmem %s2, %s157
      %p159 = scmp.lt.s32.totalorder %s17, 1
      %s160 = scalar_select %p159, %s17, 1
      %s161 = smul.addr %s160, 4
      %s162 = scalar_lea.vmem %s0, %s161
      %p163 = scmp.lt.s32.totalorder %s17, 1
      %s164 = scalar_select %p163, %s17, 1
      %s165 = scalar_lea.vmem %s1, %s164
      %p166 = scmp.lt.s32.totalorder %s17, 1
      %s167 = scalar_select %p166, %s17, 1
      %p168 = scmp.lt.s32.totalorder %s18, 0
      %s169 = scalar_select %p168, %s18, 0
      %s170 = sadd.s32 %s169, %s167
      %s171 = smul.addr %s170, 4
      %s172 = scalar_lea.vmem %s2, %s171
      %s174 = smul.u32 %s18, 8
      %v175 = vld [vmem:[%s165] sm:$0x1]
      %s176 = sshra.s32 %s174, 3
      %s177 = sand.u32 %s174, 7
      %s178 = smul.addr %s176, 4
      %s179 = scalar_lea.vmem %s162, %s178
      %v180 = vld [vmem:[%s179] sm:$0xf]
      %v181 = vld [vmem:[%s162] sm:$0xf]
      %v183 = vunpack.c.l.b16 %v181
      %v184 = vpack.c.b16 %v183, %v183
      %185 = vrot.lane.b32.xlu0 %v184, 96
      %v186 = vpop.permute.xlu0 %185
      %vm187 = vcmask 64512
      %v189 = vsel %vm187, %v180, 0
      %v192 = vsel %vm187, %v186, 0
      %194 = vmatpush.bf16.xpose.msra.mxu0 0
      %195 = vmatpush.bf16.xpose.msra.mxu0 0
      %196 = vmatpush.bf16.xpose.msra.mxu0 0
      %197 = vmatpush.bf16.xpose.msra.mxu0 0
      %198 = vmatpush.bf16.xpose.msra.mxu0 0
      %199 = vmatpush.bf16.xpose.msra.mxu0 0
      %200 = vmatpush.bf16.xpose.msra.mxu0 0
      %201 = vmatpush.bf16.xpose.msra.mxu0 %v192
      %202 = vmatmul.bf16.gmra.mxu0 %v189
      %v203 = vpop.f32.mrf.mxu0
      %v204 = vadd.f32 0.0, %v203
      %v205 = vpop.f32.mrf.mxu0
      %206 = vdwg.mxu0
      %v207 = vmul.f32 %v204, 0.35355338
      %v209 = vperm.slane %v175, 0
      %v211 = vadd.f32 %v207, %v209
      %v212 = vsel %vm187, %v211, -inf
      %213 = vmax.xlane.f32.xlu0 %v212
      %v214 = vpop.xlane.xlu0 %213
      %v215 = vsub.f32 %v211, %v214
      %v216 = vmul.f32 %v215, 1.442695
      %v217 = vpow.pop %v216
      %v218 = vsel %vm187, %v217, 0.0
      %219 = vadd.xlane.f32.xlu0 %v218
      %v220 = vpop.xlane.xlu0 %219
      %v221 = vrcp.pop %v220
      %v222 = vmul.f32 %v217, %v221
      %v223 = vpack.c.bf16 %v222, %v222
      %224 = vrot.lane.b32.xlu0 %v184, 64
      %v225 = vpop.permute.xlu0 %224
      %v227 = vsel %vm187, %v223, 0
      %vm229 = vcmask 1043456
      %v231 = vsel %vm229, %v225, 0
      %233 = vmatpush.bf16.msra.mxu0 0
      %234 = vmatpush.bf16.msra.mxu0 0
      %235 = vmatpush.bf16.msra.mxu0 0
      %236 = vmatpush.bf16.msra.mxu0 0
      %237 = vmatpush.bf16.msra.mxu0 0
      %238 = vmatpush.bf16.msra.mxu0 0
      %239 = vmatpush.bf16.msra.mxu0 0
      %240 = vmatpush.bf16.msra.mxu0 %v231
      %241 = vmatmul.bf16.gmra.mxu0 %v227
      %v242 = vpop.f32.mrf.mxu0
      %v243 = vadd.f32 0.0, %v242
      %v244 = vpop.f32.mrf.mxu0
      %245 = vdwg.mxu0
      %v246 = vpack.c.bf16 %v243, %v243
      %vm247 = vcmask 60416
      %248 = vst.msk [vmem:[%s172] sm:$0xf] %vm247, %v246
      %v250 = vunpack.c.l.b16 %v180
      %v251 = vpack.c.b16 %v250, %v250
      %252 = vrot.lane.b32.xlu0 %v251, 120
      %v253 = vpop.permute.xlu0 %252
      %254 = vrot.lane.b32.xlu0 %v184, 88
      %v255 = vpop.permute.xlu0 %254
      %v257 = vsel %vm187, %v253, 0
      %v260 = vsel %vm187, %v255, 0
      %262 = vmatpush.bf16.xpose.msra.mxu0 0
      %263 = vmatpush.bf16.xpose.msra.mxu0 0
      %264 = vmatpush.bf16.xpose.msra.mxu0 0
      %265 = vmatpush.bf16.xpose.msra.mxu0 0
      %266 = vmatpush.bf16.xpose.msra.mxu0 0
      %267 = vmatpush.bf16.xpose.msra.mxu0 0
      %268 = vmatpush.bf16.xpose.msra.mxu0 0
      %269 = vmatpush.bf16.xpose.msra.mxu0 %v260
      %270 = vmatmul.bf16.gmra.mxu0 %v257
      %v271 = vpop.f32.mrf.mxu0
      %v272 = vadd.f32 0.0, %v271
      %v273 = vpop.f32.mrf.mxu0
      %274 = vdwg.mxu0
      %v275 = vmul.f32 %v272, 0.35355338
      %v276 = vadd.f32 %v275, %v209
      %v277 = vsel %vm187, %v276, -inf
      %278 = vmax.xlane.f32.xlu0 %v277
      %v279 = vpop.xlane.xlu0 %278
      %v280 = vsub.f32 %v276, %v279
      %v281 = vmul.f32 %v280, 1.442695
      %v282 = vpow.pop %v281
      %v283 = vsel %vm187, %v282, 0.0
      %284 = vadd.xlane.f32.xlu0 %v283
      %v285 = vpop.xlane.xlu0 %284
      %v286 = vrcp.pop %v285
      %v287 = vmul.f32 %v282, %v286
      %v288 = vpack.c.bf16 %v287, %v287
      %289 = vrot.lane.b32.xlu0 %v184, 56
      %v290 = vpop.permute.xlu0 %289
      %v292 = vsel %vm187, %v288, 0
      %v295 = vsel %vm229, %v290, 0
      %297 = vmatpush.bf16.msra.mxu0 0
      %298 = vmatpush.bf16.msra.mxu0 0
      %299 = vmatpush.bf16.msra.mxu0 0
      %300 = vmatpush.bf16.msra.mxu0 0
      %301 = vmatpush.bf16.msra.mxu0 0
      %302 = vmatpush.bf16.msra.mxu0 0
      %303 = vmatpush.bf16.msra.mxu0 0
      %304 = vmatpush.bf16.msra.mxu0 %v295
      %305 = vmatmul.bf16.gmra.mxu0 %v292
      %v306 = vpop.f32.mrf.mxu0
      %v307 = vadd.f32 0.0, %v306
      %v308 = vpop.f32.mrf.mxu0
      %309 = vdwg.mxu0
      %v310 = vpack.c.bf16 %v307, %v307
      %312 = vrot.lane.b32.xlu0 %v310, 8
      %v313 = vpop.permute.xlu0 %312
      %vm315 = vcmask 126016
      %316 = vst.msk [vmem:[%s172] sm:$0xf] %vm315, %v313
      %317 = vrot.lane.b32.xlu0 %v251, 112
      %v318 = vpop.permute.xlu0 %317
      %319 = vrot.lane.b32.xlu0 %v184, 80
      %v320 = vpop.permute.xlu0 %319
      %v322 = vsel %vm187, %v318, 0
      %v325 = vsel %vm187, %v320, 0
      %327 = vmatpush.bf16.xpose.msra.mxu0 0
      %328 = vmatpush.bf16.xpose.msra.mxu0 0
      %329 = vmatpush.bf16.xpose.msra.mxu0 0
      %330 = vmatpush.bf16.xpose.msra.mxu0 0
      %331 = vmatpush.bf16.xpose.msra.mxu0 0
      %332 = vmatpush.bf16.xpose.msra.mxu0 0
      %333 = vmatpush.bf16.xpose.msra.mxu0 0
      %334 = vmatpush.bf16.xpose.msra.mxu0 %v325
      %335 = vmatmul.bf16.gmra.mxu0 %v322
      %v336 = vpop.f32.mrf.mxu0
      %v337 = vadd.f32 0.0, %v336
      %v338 = vpop.f32.mrf.mxu0
      %339 = vdwg.mxu0
      %v340 = vmul.f32 %v337, 0.35355338
      %v341 = vadd.f32 %v340, %v209
      %v342 = vsel %vm187, %v341, -inf
      %343 = vmax.xlane.f32.xlu0 %v342
      %v344 = vpop.xlane.xlu0 %343
      %v345 = vsub.f32 %v341, %v344
      %v346 = vmul.f32 %v345, 1.442695
      %v347 = vpow.pop %v346
      %v348 = vsel %vm187, %v347, 0.0
      %349 = vadd.xlane.f32.xlu0 %v348
      %v350 = vpop.xlane.xlu0 %349
      %v351 = vrcp.pop %v350
      %v352 = vmul.f32 %v347, %v351
      %v353 = vpack.c.bf16 %v352, %v352
      %354 = vrot.lane.b32.xlu0 %v184, 48
      %v355 = vpop.permute.xlu0 %354
      %v357 = vsel %vm187, %v353, 0
      %v360 = vsel %vm229, %v355, 0
      %362 = vmatpush.bf16.msra.mxu0 0
      %363 = vmatpush.bf16.msra.mxu0 0
      %364 = vmatpush.bf16.msra.mxu0 0
      %365 = vmatpush.bf16.msra.mxu0 0
      %366 = vmatpush.bf16.msra.mxu0 0
      %367 = vmatpush.bf16.msra.mxu0 0
      %368 = vmatpush.bf16.msra.mxu0 0
      %369 = vmatpush.bf16.msra.mxu0 %v360
      %370 = vmatmul.bf16.gmra.mxu0 %v357
      %v371 = vpop.f32.mrf.mxu0
      %v372 = vadd.f32 0.0, %v371
      %v373 = vpop.f32.mrf.mxu0
      %374 = vdwg.mxu0
      %v375 = vpack.c.bf16 %v372, %v372
      %377 = vrot.lane.b32.xlu0 %v375, 16
      %v378 = vpop.permute.xlu0 %377
      %vm380 = vcmask 191616
      %381 = vst.msk [vmem:[%s172] sm:$0xf] %vm380, %v378
      %382 = vrot.lane.b32.xlu0 %v251, 104
      %v383 = vpop.permute.xlu0 %382
      %384 = vrot.lane.b32.xlu0 %v184, 72
      %v385 = vpop.permute.xlu0 %384
      %v387 = vsel %vm187, %v383, 0
      %v390 = vsel %vm187, %v385, 0
      %392 = vmatpush.bf16.xpose.msra.mxu0 0
      %393 = vmatpush.bf16.xpose.msra.mxu0 0
      %394 = vmatpush.bf16.xpose.msra.mxu0 0
      %395 = vmatpush.bf16.xpose.msra.mxu0 0
      %396 = vmatpush.bf16.xpose.msra.mxu0 0
      %397 = vmatpush.bf16.xpose.msra.mxu0 0
      %398 = vmatpush.bf16.xpose.msra.mxu0 0
      %399 = vmatpush.bf16.xpose.msra.mxu0 %v390
      %400 = vmatmul.bf16.gmra.mxu0 %v387
      %v401 = vpop.f32.mrf.mxu0
      %v402 = vadd.f32 0.0, %v401
      %v403 = vpop.f32.mrf.mxu0
      %404 = vdwg.mxu0
      %v405 = vmul.f32 %v402, 0.35355338
      %v406 = vadd.f32 %v405, %v209
      %v407 = vsel %vm187, %v406, -inf
      %408 = vmax.xlane.f32.xlu0 %v407
      %v409 = vpop.xlane.xlu0 %408
      %v410 = vsub.f32 %v406, %v409
      %v411 = vmul.f32 %v410, 1.442695
      %v412 = vpow.pop %v411
      %v413 = vsel %vm187, %v412, 0.0
      %414 = vadd.xlane.f32.xlu0 %v413
      %v415 = vpop.xlane.xlu0 %414
      %v416 = vrcp.pop %v415
      %v417 = vmul.f32 %v412, %v416
      %v418 = vpack.c.bf16 %v417, %v417
      %419 = vrot.lane.b32.xlu0 %v184, 40
      %v420 = vpop.permute.xlu0 %419
      %v422 = vsel %vm187, %v418, 0
      %v425 = vsel %vm229, %v420, 0
      %427 = vmatpush.bf16.msra.mxu0 0
      %428 = vmatpush.bf16.msra.mxu0 0
      %429 = vmatpush.bf16.msra.mxu0 0
      %430 = vmatpush.bf16.msra.mxu0 0
      %431 = vmatpush.bf16.msra.mxu0 0
      %432 = vmatpush.bf16.msra.mxu0 0
      %433 = vmatpush.bf16.msra.mxu0 0
      %434 = vmatpush.bf16.msra.mxu0 %v425
      %435 = vmatmul.bf16.gmra.mxu0 %v422
      %v436 = vpop.f32.mrf.mxu0
      %v437 = vadd.f32 0.0, %v436
      %v438 = vpop.f32.mrf.mxu0
      %439 = vdwg.mxu0
      %v440 = vpack.c.bf16 %v437, %v437
      %442 = vrot.lane.b32.xlu0 %v440, 24
      %v443 = vpop.permute.xlu0 %442
      %vm445 = vcmask 257216
      %446 = vst.msk [vmem:[%s172] sm:$0xf] %vm445, %v443
      %p447 = scmp.lt.s32.totalorder %s17, 1
      %s448 = scalar_select %p447, %s17, 1
      %p449 = scmp.lt.s32.totalorder %s18, 0
      %s450 = scalar_select %p449, %s18, 0
      %s451 = sadd.s32 %s450, %s448
      %s452 = smul.addr %s451, 4
      %s453 = scalar_lea.vmem %s2, %s452
      // Predicated region
      $region29: #{bert_classifier_forward.12} parent=27 // pred_check
        %p454 = pneg %p97
      $region30: #{bert_classifier_forward.12} parent=27 // pred_check_branch
        %456 = sbr.rel (%p454) target = $region32
      $region31: #{bert_classifier_forward.12} parent=27 // pred_region
        _
      $region32: #{bert_classifier_forward.12} parent=27 // pred_fallthru
        _
    $region28: #{bert_classifier_forward.12} parent=5 // pred_fallthru
      _
    %p457 = scmp.le.s32.totalorder 2, %s8
    // Predicated region
    $region33: #{bert_classifier_forward.12} parent=5 // pred_check
      %p458 = pneg %p457
    $region34: #{bert_classifier_forward.12} parent=5 // pred_check_branch
      %460 = sbr.rel (%p458) target = $region36
    $region35: #{bert_classifier_forward.12} parent=5 // pred_region
      %s461 = ssub.s32 %s8, 2
      // Predicated region
      $region37: #{bert_classifier_forward.12} parent=35 // pred_check
        %p462 = pneg %p103
      $region38: #{bert_classifier_forward.12} parent=35 // pred_check_branch
        %464 = sbr.rel (%p462) target = $region40
      $region39: #{bert_classifier_forward.12} parent=35 // pred_region
        %p465 = scmp.lt.s32.totalorder %s19, 1
        %s466 = scalar_select %p465, %s19, 1
        %p467 = scmp.lt.s32.totalorder %s20, 0
        %s468 = scalar_select %p467, %s20, 0
        %s469 = sadd.s32 %s468, %s466
        %s470 = smul.addr %s469, 4
        %s471 = scalar_lea.vmem %s2, %s470
      $region40: #{bert_classifier_forward.12} parent=35 // pred_fallthru
        _
    $region36: #{bert_classifier_forward.12} parent=5 // pred_fallthru
      _
  $region6: #{bert_classifier_forward.12} parent=0 // loop_footer
    %s12 = sadd.s32 1, %s8
  $region7: #{bert_classifier_forward.12} parent=0 // loop_footer_branch
    %7 = sbr.rel target = $region3
  $region8: #{bert_classifier_forward.12} parent=0 // loop_exit
    _

// kernel: bert_classifier_forward.19
$region0: #{bert_classifier_forward.19}
  #allocation0 [shape = 'u32[]', space=smem, size = 0x4, offset = 0x4, fixed_abs, tag = 'smem constant byte address 0x4 - core index']
  #allocation1 [shape = 'u32[72,128]{1,0:T(1,128)}', space=vmem, size = 0x9000, scoped, tag = 'internal scratch']
  %s0 = inlined_call_operand.vmem [shape: bf16[2,32], index: 0, kind: input, shape index: {}]
  %s1 = inlined_call_operand.vmem [shape: bf16[32,32], index: 1, kind: input, shape index: {}]
  %s2 = inlined_call_operand.vmem [shape: f32[1,32], index: 2, kind: input, shape index: {}]
  %s3 = inlined_call_operand.vmem [shape: bf16[32,128], index: 3, kind: input, shape index: {}]
  %s4 = inlined_call_operand.vmem [shape: f32[1,128], index: 4, kind: input, shape index: {}]
  %s5 = inlined_call_operand.vmem [shape: f32[2,128], index: 5, kind: output, shape index: {}]
  %s6 = sld [smem:[#allocation0]]
  $region30: #{bert_classifier_forward.19} parent=0
    _
  %s8 = ssub.s32 1, %s6
  %s9 = scalar_select 0, %s8, %s6
  // Predicated region
  $region2: #{bert_classifier_forward.19} parent=0 // pred_check
    _
  $region3: #{bert_classifier_forward.19} parent=0 // pred_check_branch
    %11 = sbr.rel (0) target = $region5
  $region4: #{bert_classifier_forward.19} parent=0 // pred_region
    _
  $region5: #{bert_classifier_forward.19} parent=0 // pred_fallthru
    _
  // Predicated region
  $region6: #{bert_classifier_forward.19} parent=0 // pred_check
    _
  $region7: #{bert_classifier_forward.19} parent=0 // pred_check_branch
    %13 = sbr.rel (0) target = $region9
  $region8: #{bert_classifier_forward.19} parent=0 // pred_region
    _
  $region9: #{bert_classifier_forward.19} parent=0 // pred_fallthru
    _
  // Predicated region
  $region10: #{bert_classifier_forward.19} parent=0 // pred_check
    _
  $region11: #{bert_classifier_forward.19} parent=0 // pred_check_branch
    %15 = sbr.rel (0) target = $region13
  $region12: #{bert_classifier_forward.19} parent=0 // pred_region
    _
  $region13: #{bert_classifier_forward.19} parent=0 // pred_fallthru
    _
  // Predicated region
  $region14: #{bert_classifier_forward.19} parent=0 // pred_check
    _
  $region15: #{bert_classifier_forward.19} parent=0 // pred_check_branch
    %17 = sbr.rel (0) target = $region17
  $region16: #{bert_classifier_forward.19} parent=0 // pred_region
    _
  $region17: #{bert_classifier_forward.19} parent=0 // pred_fallthru
    _
  // Predicated region
  $region18: #{bert_classifier_forward.19} parent=0 // pred_check
    _
  $region19: #{bert_classifier_forward.19} parent=0 // pred_check_branch
    %19 = sbr.rel (0) target = $region21
  $region20: #{bert_classifier_forward.19} parent=0 // pred_region
    _
  $region21: #{bert_classifier_forward.19} parent=0 // pred_fallthru
    _
  %v21 = vld [vmem:[%s0] sm:$0x1]
  %v22 = vld [vmem:[%s1] sm:$0xf]
  %v23 = vld [vmem:[%s1 + $0x4] sm:$0xf]
  %v24 = vld [vmem:[%s1 + $0x8] sm:$0xf]
  %v25 = vld [vmem:[%s1 + $0xc] sm:$0xf]
  %v26 = vld [vmem:[%s2] sm:$0x1]
  %v28 = vperm.slane %v26, 0
  %v34 = vunpack.c.l.b16 %v22
  %v35 = vunpack.c.l.b16 %v23
  %v36 = vunpack.c.l.b16 %v24
  %v37 = vunpack.c.l.b16 %v25
  %v38 = vpack.c.b16 %v35, %v34
  %v39 = vpack.c.b16 %v37, %v36
  %vm42 = vcmask 261120
  %v44 = vsel %vm42, %v21, 0
  %46 = vmatpush.bf16.msra.mxu0 0
  %47 = vmatpush.bf16.msra.mxu0 0
  %48 = vmatpush.bf16.msra.mxu0 0
  %49 = vmatpush.bf16.msra.mxu0 0
  %50 = vmatpush.bf16.msra.mxu0 0
  %51 = vmatpush.bf16.msra.mxu0 0
  %52 = vmatpush.bf16.msra.mxu0 %v39
  %53 = vmatpush.bf16.msra.mxu0 %v38
  %54 = vmatmul.bf16.gmra.mxu0 %v44
  %v55 = vpop.f32.mrf.mxu0
  %v56 = vadd.f32 %v28, %v55
  %v57 = vpop.f32.mrf.mxu0
  %58 = vdwg.mxu0
  %v59 = vtanh.pop %v56
  %v60 = vpack.c.bf16 %v59, %v59
  %v61 = vld [vmem:[%s3] sm:$0xf]
  %v62 = vld [vmem:[%s3 + $0x4] sm:$0xf]
  %v63 = vld [vmem:[%s3 + $0x8] sm:$0xf]
  %v64 = vld [vmem:[%s3 + $0xc] sm:$0xf]
  %v65 = vld [vmem:[%s4] sm:$0x1]
  %v67 = vperm.slane %v65, 0
  %v73 = vunpack.c.l.b16 %v61
  %v74 = vunpack.c.l.b16 %v62
  %v75 = vunpack.c.l.b16 %v63
  %v76 = vunpack.c.l.b16 %v64
  %v77 = vpack.c.b16 %v74, %v73
  %v78 = vpack.c.b16 %v76, %v75
  %v82 = vsel %vm42, %v60, 0
  %84 = vmatpush.bf16.msra.mxu0 0
  %85 = vmatpush.bf16.msra.mxu0 0
  %86 = vmatpush.bf16.msra.mxu0 0
  %87 = vmatpush.bf16.msra.mxu0 0
  %88 = vmatpush.bf16.msra.mxu0 0
  %89 = vmatpush.bf16.msra.mxu0 0
  %90 = vmatpush.bf16.msra.mxu0 %v78
  %91 = vmatpush.bf16.msra.mxu0 %v77
  %92 = vmatmul.bf16.gmra.mxu0 %v82
  %v93 = vpop.f32.mrf.mxu0
  %v94 = vadd.f32 %v67, %v93
  %v95 = vpop.f32.mrf.mxu0
  %96 = vdwg.mxu0
  %v97 = vtanh.pop %v94
  %98 = vst [vmem:[%s5] sm:$0x3] %v97
  // Predicated region
  $region22: #{bert_classifier_forward.19} parent=0 // pred_check
    _
  $region23: #{bert_classifier_forward.19} parent=0 // pred_check_branch
    %100 = sbr.rel (0) target = $region25
  $region24: #{bert_classifier_forward.19} parent=0 // pred_region
    _
  $region25: #{bert_classifier_forward.19} parent=0 // pred_fallthru
    _
  // Predicated region
  $region26: #{bert_classifier_forward.19} parent=0 // pred_check
    _
  $region27: #{bert_classifier_forward.19} parent=0 // pred_check_branch
    %102 = sbr.rel (0) target = $region29
  $region28: #{bert_classifier_forward.19} parent=0 // pred_region
    _
  $region29: #{bert_classifier_forward.19} parent=0 // pred_fallthru
    _

// kernel: bert_classifier_forward.14
$region0: #{bert_classifier_forward.14}
  #allocation0 [shape = 'u32[]', space=smem, size = 0x4, offset = 0x4, fixed_abs, tag = 'smem constant byte address 0x4 - core index']
  #allocation1 [shape = 'u32[72,128]{1,0:T(1,128)}', space=vmem, size = 0x9000, scoped, tag = 'internal scratch']
  #allocation2 [shape = 'f32[16,32]{1,0:T(8,128)}', space=vmem, size = 0x2000, scoped, tag = 'scratch operand']
  %s0 = inlined_call_operand.vmem [shape: bf16[16,32], index: 0, kind: input, shape index: {}]
  %s1 = inlined_call_operand.vmem [shape: bf16[32,64], index: 1, kind: input, shape index: {}]
  %s2 = inlined_call_operand.vmem [shape: f32[1,64], index: 2, kind: input, shape index: {}]
  %s3 = inlined_call_operand.vmem [shape: bf16[64,32], index: 3, kind: input, shape index: {}]
  %s4 = inlined_call_operand.vmem [shape: f32[1,32], index: 4, kind: input, shape index: {}]
  %s5 = inlined_call_operand.vmem [shape: f32[1,32], index: 5, kind: input, shape index: {}]
  %s6 = inlined_call_operand.vmem [shape: f32[1,32], index: 6, kind: input, shape index: {}]
  %s7 = inlined_call_operand.vmem [shape: bf16[16,32], index: 7, kind: output, shape index: {}]
  %s8 = sld [smem:[#allocation0]]
  $region46: #{bert_classifier_forward.14} parent=0
    _
  %s10 = ssub.s32 1, %s8
  %s11 = scalar_select 0, %s10, %s8
  // Predicated region
  $region2: #{bert_classifier_forward.14} parent=0 // pred_check
    _
  $region3: #{bert_classifier_forward.14} parent=0 // pred_check_branch
    %13 = sbr.rel (0) target = $region5
  $region4: #{bert_classifier_forward.14} parent=0 // pred_region
    _
  $region5: #{bert_classifier_forward.14} parent=0 // pred_fallthru
    _
  // Predicated region
  $region6: #{bert_classifier_forward.14} parent=0 // pred_check
    _
  $region7: #{bert_classifier_forward.14} parent=0 // pred_check_branch
    %15 = sbr.rel (0) target = $region9
  $region8: #{bert_classifier_forward.14} parent=0 // pred_region
    _
  $region9: #{bert_classifier_forward.14} parent=0 // pred_fallthru
    _
  // Predicated region
  $region10: #{bert_classifier_forward.14} parent=0 // pred_check
    _
  $region11: #{bert_classifier_forward.14} parent=0 // pred_check_branch
    %17 = sbr.rel (0) target = $region13
  $region12: #{bert_classifier_forward.14} parent=0 // pred_region
    _
  $region13: #{bert_classifier_forward.14} parent=0 // pred_fallthru
    _
  // Predicated region
  $region14: #{bert_classifier_forward.14} parent=0 // pred_check
    _
  $region15: #{bert_classifier_forward.14} parent=0 // pred_check_branch
    %19 = sbr.rel (0) target = $region17
  $region16: #{bert_classifier_forward.14} parent=0 // pred_region
    _
  $region17: #{bert_classifier_forward.14} parent=0 // pred_fallthru
    _
  // Predicated region
  $region18: #{bert_classifier_forward.14} parent=0 // pred_check
    _
  $region19: #{bert_classifier_forward.14} parent=0 // pred_check_branch
    %21 = sbr.rel (0) target = $region21
  $region20: #{bert_classifier_forward.14} parent=0 // pred_region
    _
  $region21: #{bert_classifier_forward.14} parent=0 // pred_fallthru
    _
  // Predicated region
  $region22: #{bert_classifier_forward.14} parent=0 // pred_check
    _
  $region23: #{bert_classifier_forward.14} parent=0 // pred_check_branch
    %23 = sbr.rel (0) target = $region25
  $region24: #{bert_classifier_forward.14} parent=0 // pred_region
    _
  $region25: #{bert_classifier_forward.14} parent=0 // pred_fallthru
    _
  // Predicated region
  $region26: #{bert_classifier_forward.14} parent=0 // pred_check
    _
  $region27: #{bert_classifier_forward.14} parent=0 // pred_check_branch
    %25 = sbr.rel (0) target = $region29
  $region28: #{bert_classifier_forward.14} parent=0 // pred_region
    _
  $region29: #{bert_classifier_forward.14} parent=0 // pred_fallthru
    _
  %p27 = scmp.eq.s32.totalorder 0, 0
  // Predicated region
  $region30: #{bert_classifier_forward.14} parent=0 // pred_check
    %p28 = pneg %p27
  $region31: #{bert_classifier_forward.14} parent=0 // pred_check_branch
    %30 = sbr.rel (%p28) target = $region33
  $region32: #{bert_classifier_forward.14} parent=0 // pred_region
    %vm31 = vcmask 261120
    %32 = vst.msk [vmem:[#allocation2] sm:$0xff] %vm31, 0.0
    %33 = vst.msk [vmem:[#allocation2 + $0x8] sm:$0xff] %vm31, 0.0
  $region33: #{bert_classifier_forward.14} parent=0 // pred_fallthru
    _
  %v34 = vld [vmem:[%s0] sm:$0xf]
  %v35 = vld [vmem:[%s0 + $0x4] sm:$0xf]
  %v36 = vld [vmem:[%s1] sm:$0xf]
  %v37 = vld [vmem:[%s1 + $0x4] sm:$0xf]
  %v38 = vld [vmem:[%s1 + $0x8] sm:$0xf]
  %v39 = vld [vmem:[%s1 + $0xc] sm:$0xf]
  %v40 = vld [vmem:[%s2] sm:$0x1]
  %v42 = vperm.slane %v40, 0
  %v46 = vunpack.c.l.b16 %v34
  %v47 = vunpack.c.l.b16 %v35
  %v48 = vpack.c.b16 %v47, %v46
  %v53 = vunpack.c.l.b16 %v36
  %v54 = vunpack.c.l.b16 %v37
  %v55 = vunpack.c.l.b16 %v38
  %v56 = vunpack.c.l.b16 %v39
  %v57 = vpack.c.b16 %v54, %v53
  %v58 = vpack.c.b16 %v56, %v55
  %vm61 = vcmask 261120
  %v63 = vsel %vm61, %v48, 0
  %65 = vmatpush.bf16.msra.mxu0 0
  %66 = vmatpush.bf16.msra.mxu0 0
  %67 = vmatpush.bf16.msra.mxu0 0
  %68 = vmatpush.bf16.msra.mxu0 0
  %69 = vmatpush.bf16.msra.mxu0 0
  %70 = vmatpush.bf16.msra.mxu0 0
  %71 = vmatpush.bf16.msra.mxu0 %v58
  %72 = vmatpush.bf16.msra.mxu0 %v57
  %73 = vmatmul.bf16.gmra.mxu0 %v63
  %v74 = vpop.f32.mrf.mxu0
  %v75 = vadd.f32 %v42, %v74
  %v76 = vpop.f32.mrf.mxu0
  %v77 = vadd.f32 %v42, %v76
  %78 = vdwg.mxu0
  %v79 = vmul.f32 %v75, 0.5
  %v80 = vmul.f32 %v77, 0.5
  %v81 = vmul.f32 %v75, 0.044715
  %v82 = vmul.f32 %v77, 0.044715
  %v83 = vmul.f32 %v81, %v75
  %v84 = vmul.f32 %v82, %v77
  %v85 = vmul.f32 %v83, %v75
  %v86 = vmul.f32 %v84, %v77
  %v87 = vadd.f32 %v75, %v85
  %v88 = vadd.f32 %v77, %v86
  %v89 = vmul.f32 %v87, 0.7978846
  %v90 = vmul.f32 %v88, 0.7978846
  %v91 = vtanh.pop %v89
  %v92 = vtanh.pop %v90
  %v93 = vadd.f32 %v91, 1.0
  %v94 = vadd.f32 %v92, 1.0
  %v95 = vmul.f32 %v79, %v93
  %v96 = vmul.f32 %v80, %v94
  %v97 = vld [vmem:[#allocation2] sm:$0xff]
  %v98 = vld [vmem:[#allocation2 + $0x8] sm:$0xff]
  %v99 = vpack.c.bf16 %v96, %v95
  %v100 = vld [vmem:[%s3] sm:$0xf]
  %v101 = vld [vmem:[%s3 + $0x4] sm:$0xf]
  %v102 = vld [vmem:[%s3 + $0x8] sm:$0xf]
  %v103 = vld [vmem:[%s3 + $0xc] sm:$0xf]
  %v104 = vld [vmem:[%s3 + $0x10] sm:$0xf]
  %v105 = vld [vmem:[%s3 + $0x14] sm:$0xf]
  %v106 = vld [vmem:[%s3 + $0x18] sm:$0xf]
  %v107 = vld [vmem:[%s3 + $0x1c] sm:$0xf]
  %v116 = vunpack.c.l.b16 %v100
  %v117 = vunpack.c.l.b16 %v101
  %v118 = vunpack.c.l.b16 %v102
  %v119 = vunpack.c.l.b16 %v103
  %v120 = vunpack.c.l.b16 %v104
  %v121 = vunpack.c.l.b16 %v105
  %v122 = vunpack.c.l.b16 %v106
  %v123 = vunpack.c.l.b16 %v107
  %v124 = vpack.c.b16 %v117, %v116
  %v125 = vpack.c.b16 %v119, %v118
  %v126 = vpack.c.b16 %v121, %v120
  %v127 = vpack.c.b16 %v123, %v122
  %vm132 = vcmask 523264
  %v134 = vsel %vm132, %v99, 0
  %136 = vmatpush.bf16.msra.mxu0 0
  %137 = vmatpush.bf16.msra.mxu0 0
  %138 = vmatpush.bf16.msra.mxu0 0
  %139 = vmatpush.bf16.msra.mxu0 0
  %140 = vmatpush.bf16.msra.mxu0 %v127
  %141 = vmatpush.bf16.msra.mxu0 %v126
  %142 = vmatpush.bf16.msra.mxu0 %v125
  %143 = vmatpush.bf16.msra.mxu0 %v124
  %144 = vmatmul.bf16.gmra.mxu0 %v134
  %v145 = vpop.f32.mrf.mxu0
  %v146 = vadd.f32 0.0, %v145
  %v147 = vpop.f32.mrf.mxu0
  %v148 = vadd.f32 0.0, %v147
  %149 = vdwg.mxu0
  %v150 = vadd.f32 %v97, %v146
  %v151 = vadd.f32 %v98, %v148
  %152 = vst.msk [vmem:[#allocation2] sm:$0xff] %vm61, %v150
  %153 = vst.msk [vmem:[#allocation2 + $0x8] sm:$0xff] %vm61, %v151
  // Predicated region
  $region34: #{bert_classifier_forward.14} parent=0 // pred_check
    %p154 = pneg %p27
  $region35: #{bert_classifier_forward.14} parent=0 // pred_check_branch
    %156 = sbr.rel (%p154) target = $region37
  $region36: #{bert_classifier_forward.14} parent=0 // pred_region
    %v157 = vld [vmem:[#allocation2] sm:$0xff]
    %v158 = vld [vmem:[#allocation2 + $0x8] sm:$0xff]
    %v159 = vld [vmem:[%s4] sm:$0x1]
    %v161 = vperm.slane %v159, 0
    %v163 = vadd.f32 %v157, %v161
    %v164 = vadd.f32 %v158, %v161
    %v165 = vld [vmem:[%s0] sm:$0xf]
    %v166 = vld [vmem:[%s0 + $0x4] sm:$0xf]
    %v167 = vunpack.c.l.bf16 %v165
    %v168 = vunpack.c.l.bf16 %v166
    %v169 = vadd.f32 %v163, %v167
    %v170 = vadd.f32 %v164, %v168
    %v171 = vsel %vm61, %v169, 0.0
    %172 = vadd.xlane.f32.xlu0 %v171
    %v173 = vpop.xlane.xlu0 %172
    %v174 = vsel %vm61, %v170, 0.0
    %175 = vadd.xlane.f32.xlu0 %v174
    %v176 = vpop.xlane.xlu0 %175
    %v177 = vrcp.pop 32.0
    %v178 = vmul.f32 32.0, %v177
    %v179 = vsub.f32 1.0, %v178
    %v180 = vmul.f32 %v177, %v179
    %v181 = vadd.f32 %v177, %v180
    %vm182 = vweird.f32 %v177
    %v183 = vsel %vm182, %v177, %v181
    %v184 = vmul.f32 %v173, %v183
    %v185 = vmul.f32 %v176, %v183
    %v186 = vsub.f32 %v169, %v184
    %v187 = vsub.f32 %v170, %v185
    %v188 = vmul.f32 %v186, %v186
    %v189 = vmul.f32 %v187, %v187
    %v190 = vsel %vm61, %v188, 0.0
    %191 = vadd.xlane.f32.xlu0 %v190
    %v192 = vpop.xlane.xlu0 %191
    %v193 = vsel %vm61, %v189, 0.0
    %194 = vadd.xlane.f32.xlu0 %v193
    %v195 = vpop.xlane.xlu0 %194
    %v196 = vmul.f32 %v192, %v183
    %v197 = vmul.f32 %v195, %v183
    %v198 = vadd.f32 %v196, 1e-12
    %v199 = vadd.f32 %v197, 1e-12
    %v200 = vrsqrt.pop %v198
    %v201 = vmul.f32 %v200, %v198
    %v202 = vmul.f32 %v201, %v200
    %v203 = vmul.f32 0.5, %v202
    %v204 = vsub.f32 1.5, %v203
    %v205 = vmul.f32 %v200, %v204
    %vm206 = vweird.f32 %v198
    %vm207 = vweird.f32 %v200
    %vm208 = vmor %vm206, %vm207
    %v209 = vsel %vm208, %v200, %v205
    %v210 = vrsqrt.pop %v199
    %v211 = vmul.f32 %v210, %v199
    %v212 = vmul.f32 %v211, %v210
    %v213 = vmul.f32 0.5, %v212
    %v214 = vsub.f32 1.5, %v213
    %v215 = vmul.f32 %v210, %v214
    %vm216 = vweird.f32 %v199
    %vm217 = vweird.f32 %v210
    %vm218 = vmor %vm216, %vm217
    %v219 = vsel %vm218, %v210, %v215
    %v220 = vmul.f32 %v186, %v209
    %v221 = vmul.f32 %v187, %v219
    %v222 = vld [vmem:[%s5] sm:$0x1]
    %v224 = vperm.slane %v222, 0
    %v226 = vmul.f32 %v220, %v224
    %v227 = vmul.f32 %v221, %v224
    %v228 = vld [vmem:[%s6] sm:$0x1]
    %v230 = vperm.slane %v228, 0
    %v232 = vadd.f32 %v226, %v230
    %v233 = vadd.f32 %v227, %v230
    %v234 = vpack.c.bf16 %v232, %v232
    %v235 = vpack.c.bf16 %v233, %v233
    %vm236 = vcmask 257024
    %237 = vst.msk [vmem:[%s7] sm:$0xf] %vm236, %v234
    %238 = vst.msk [vmem:[%s7 + $0x4] sm:$0xf] %vm236, %v235
  $region37: #{bert_classifier_forward.14} parent=0 // pred_fallthru
    _
  // Predicated region
  $region38: #{bert_classifier_forward.14} parent=0 // pred_check
    _
  $region39: #{bert_classifier_forward.14} parent=0 // pred_check_branch
    %240 = sbr.rel (0) target = $region41
  $region40: #{bert_classifier_forward.14} parent=0 // pred_region
    _
  $region41: #{bert_classifier_forward.14} parent=0 // pred_fallthru
    _
  // Predicated region
  $region42: #{bert_classifier_forward.14} parent=0 // pred_check
    _
  $region43: #{bert_classifier_forward.14} parent=0 // pred_check_branch
    %242 = sbr.rel (0) target = $region45
  $region44: #{bert_classifier_forward.14} parent=0 // pred_region
    _
  $region45: #{bert_classifier_forward.14} parent=0 // pred_fallthru
    _

</llo_original>
